<compile_context>
chip_gen: v6e
topology: v6e:2x2x1
jax: 0.10.0
libtpu: 0.0.40
codegen_flags: <defaults>
</compile_context>

<pallas_src>
import jax
import jax.numpy as jnp
from jax.experimental import pallas as pl
from jax.experimental.pallas import tpu as pltpu


# ---------------- model configuration (small, synthetic) ----------------
B = 256                 # batch (demo size; wrapper pads any B to the tile)
D_IN = 32               # input features
LAYER_DIMS = [64, 64]   # two FFLinear layers: 32->64, 64->64
N_CLASSES = 10
CLS_PAD = 128           # lane-dense padded class dim for the output store
EPS = 1e-4              # fflib FFLinear normalization epsilon
TB = 128                # batch tile (rows per grid step)


def ffc_kernel(x_ref, w1_ref, b1_ref, w2_ref, b2_ref, wc1_ref, wc2_ref, bc_ref,
               out_ref):
    """One batch tile of the full FFC forward; weights stay VMEM-resident."""
    x = x_ref[...]                                           # f32 [TB, D_IN]

    # --- FFLinear 1: L2-normalize (eps on the norm) -> matmul -> bias -> relu
    n1 = jnp.sqrt(jnp.sum(x * x, axis=1, keepdims=True))
    xn = x * pl.reciprocal(n1 + EPS, approx=True)            # EUP recip + VPU mul
    h1 = jnp.dot(xn.astype(jnp.bfloat16), w1_ref[...],
                 preferred_element_type=jnp.float32) + b1_ref[...]
    h1 = jnp.maximum(h1, 0.0)

    # --- FFLinear 2
    n2 = jnp.sqrt(jnp.sum(h1 * h1, axis=1, keepdims=True))
    h1n = h1 * pl.reciprocal(n2 + EPS, approx=True)
    h2 = jnp.dot(h1n.astype(jnp.bfloat16), w2_ref[...],
                 preferred_element_type=jnp.float32) + b2_ref[...]
    h2 = jnp.maximum(h2, 0.0)

    # --- classifier over concat(h1, h2): split-K sum of dots (no lane concat)
    logits = (jnp.dot(h1.astype(jnp.bfloat16), wc1_ref[...],
                      preferred_element_type=jnp.float32)
              + jnp.dot(h2.astype(jnp.bfloat16), wc2_ref[...],
                        preferred_element_type=jnp.float32)
              + bc_ref[...])
    out_ref[...] = jnp.maximum(logits, 0.0)        # lane-dense [TB, 128] store


def ffc_logits(x, w1, b1, w2, b2, wc, bc, *, tb=TB):
    """Batch-gridded pallas_call; returns f32 logits [B, N_CLASSES]."""
    b, d_in = x.shape
    h1, h2 = w1.shape[1], w2.shape[1]
    n_cls = wc.shape[1]

    # bf16 MXU operands (f32 accumulation inside the kernel); biases stay f32.
    w1b = w1.astype(jnp.bfloat16)
    w2b = w2.astype(jnp.bfloat16)
    # Split the classifier weight along its K axis (concat(h1,h2) -> sum of
    # dots) and zero-pad the class axis to 128 for an unmasked output store.
    wc_pad = jnp.zeros((h1 + h2, CLS_PAD), jnp.float32).at[:, :n_cls].set(wc)
    wc1b = wc_pad[:h1].astype(jnp.bfloat16)
    wc2b = wc_pad[h1:].astype(jnp.bfloat16)
    bc_pad = jnp.zeros((1, CLS_PAD), jnp.float32).at[:, :n_cls].set(bc)

    # Pad batch to a multiple of the tile (padded rows are zeros; eps keeps the
    # normalization finite and the rows are sliced away afterwards).
    b_pad = pl.cdiv(b, tb) * tb
    x_pad = jnp.zeros((b_pad, d_in), jnp.float32).at[:b].set(
        x.astype(jnp.float32))

    out = pl.pallas_call(
        ffc_kernel,
        out_shape=jax.ShapeDtypeStruct((b_pad, CLS_PAD), jnp.float32),
        grid=(b_pad // tb,),
        in_specs=[
            pl.BlockSpec((tb, d_in), lambda i: (i, 0)),      # stream batch
            pl.BlockSpec((d_in, h1), lambda i: (0, 0)),      # resident weights
            pl.BlockSpec((1, h1), lambda i: (0, 0)),
            pl.BlockSpec((h1, h2), lambda i: (0, 0)),
            pl.BlockSpec((1, h2), lambda i: (0, 0)),
            pl.BlockSpec((h1, CLS_PAD), lambda i: (0, 0)),
            pl.BlockSpec((h2, CLS_PAD), lambda i: (0, 0)),
            pl.BlockSpec((1, CLS_PAD), lambda i: (0, 0)),
        ],
        out_specs=pl.BlockSpec((tb, CLS_PAD), lambda i: (i, 0)),
        compiler_params=pltpu.CompilerParams(
            dimension_semantics=("parallel",),   # both v7x TensorCores
        ),
    )(x_pad, w1b, b1, w2b, b2, wc1b, wc2b, bc_pad)
    return out[:b, :n_cls]


def ffc_forward(x, w1, b1, w2, b2, wc, bc):
    """Module forward: logits kernel + argmax in the XLA wrapper (int32)."""
    logits = ffc_logits(x, w1, b1, w2, b2, wc, bc)
    return jnp.argmax(logits, axis=1).astype(jnp.int32)


def ffc_reference_logits(x, w1, b1, w2, b2, wc, bc):
    """Pure-JAX matched-precision reference (bf16 MXU inputs, f32 accum)."""
    def norm(v):
        return v / (jnp.sqrt(jnp.sum(v * v, axis=1, keepdims=True)) + EPS)

    def dot(a, w):
        return jnp.dot(a.astype(jnp.bfloat16), w.astype(jnp.bfloat16),
                       preferred_element_type=jnp.float32)

    h1 = jnp.maximum(dot(norm(x), w1) + b1, 0.0)
    h2 = jnp.maximum(dot(norm(h1), w2) + b2, 0.0)
    feats = jnp.concatenate([h1, h2], axis=1)
    return jnp.maximum(dot(feats, wc) + bc, 0.0)


if __name__ == "__main__":
    key = jax.random.PRNGKey(0)
    ks = jax.random.split(key, 8)

    # deterministic synthetic parameters (nn.Linear weights stored as [in, out])
    w1 = jax.random.normal(ks[0], (D_IN, LAYER_DIMS[0]), jnp.float32) * 0.1
    b1 = jax.random.normal(ks[1], (1, LAYER_DIMS[0]), jnp.float32) * 0.01
    w2 = jax.random.normal(ks[2], (LAYER_DIMS[0], LAYER_DIMS[1]), jnp.float32) * 0.1
    b2 = jax.random.normal(ks[3], (1, LAYER_DIMS[1]), jnp.float32) * 0.01
    in_features = sum(LAYER_DIMS)                   # concat of all layer outputs
    wc = jax.random.normal(ks[4], (in_features, N_CLASSES), jnp.float32) * 0.1
    bc = jax.random.normal(ks[5], (1, N_CLASSES), jnp.float32) * 0.01

    x = jax.random.normal(ks[6], (B, D_IN), jnp.float32)

    logits_k = jax.block_until_ready(ffc_logits(x, w1, b1, w2, b2, wc, bc))
    pred = jax.block_until_ready(ffc_forward(x, w1, b1, w2, b2, wc, bc))
    logits_r = jax.block_until_ready(
        ffc_reference_logits(x, w1, b1, w2, b2, wc, bc))

    assert pred.shape == (B,)
    assert pred.dtype == jnp.int32
    assert logits_k.shape == (B, N_CLASSES)

    # Logits match a matched-precision reference (only the approx reciprocal
    # and f32-accumulation order differ).
    assert bool(jnp.allclose(logits_k, logits_r, atol=2e-2, rtol=2e-2)), (
        float(jnp.max(jnp.abs(logits_k - logits_r))))

    # Argmax agrees everywhere except numerically-tied rows (bf16/approx-recip
    # tolerance); ties may legitimately resolve either way.
    pred_r = jnp.argmax(logits_r, axis=1).astype(jnp.int32)
    top2 = jax.lax.top_k(logits_r, 2)[0]
    gap = top2[:, 0] - top2[:, 1]
    assert bool(jnp.all((pred == pred_r) | (gap < 1e-3))), (pred, pred_r)

    # TODO(synk): FFLinear source not provided; assumed fflib's standard
    # forward (L2-normalize over dim=1 with eps=1e-4 on the norm, Linear, ReLU).
    print("KERNEL_OK")
</pallas_src>

<mosaic_0001>
module attributes {stable_mosaic.version = 11 : i64} {
  func.func @ffc_kernel(%arg0: i32, %arg1: memref<128x32xf32, #tpu.memory_space<vmem>>, %arg2: memref<32x64xbf16, #tpu.memory_space<vmem>>, %arg3: memref<1x64xf32, #tpu.memory_space<vmem>>, %arg4: memref<64x64xbf16, #tpu.memory_space<vmem>>, %arg5: memref<1x64xf32, #tpu.memory_space<vmem>>, %arg6: memref<64x128xbf16, #tpu.memory_space<vmem>>, %arg7: memref<64x128xbf16, #tpu.memory_space<vmem>>, %arg8: memref<1x128xf32, #tpu.memory_space<vmem>>, %arg9: memref<128x128xf32, #tpu.memory_space<vmem>>) attributes {dimension_semantics = [#tpu.dimension_semantics<parallel>], iteration_bounds = array<i64: 2>, scalar_prefetch = 0 : i64, scratch_operands = 0 : i64, tpu.core_type = #tpu.core_type<tc>, window_params = [{transform_indices = @transform_0, window_bounds = array<i64: 128, 32>}, {pipeline_mode = #tpu.pipeline_mode<synchronous>, transform_indices = @transform_1, window_bounds = array<i64: 32, 64>}, {pipeline_mode = #tpu.pipeline_mode<synchronous>, transform_indices = @transform_2, window_bounds = array<i64: 1, 64>}, {pipeline_mode = #tpu.pipeline_mode<synchronous>, transform_indices = @transform_3, window_bounds = array<i64: 64, 64>}, {pipeline_mode = #tpu.pipeline_mode<synchronous>, transform_indices = @transform_4, window_bounds = array<i64: 1, 64>}, {pipeline_mode = #tpu.pipeline_mode<synchronous>, transform_indices = @transform_5, window_bounds = array<i64: 64, 128>}, {pipeline_mode = #tpu.pipeline_mode<synchronous>, transform_indices = @transform_6, window_bounds = array<i64: 64, 128>}, {pipeline_mode = #tpu.pipeline_mode<synchronous>, transform_indices = @transform_7, window_bounds = array<i64: 1, 128>}, {transform_indices = @transform_8, window_bounds = array<i64: 128, 128>}]} {
    %c0 = arith.constant 0 : index
    %c0_0 = arith.constant 0 : index
    %0 = vector.load %arg1[%c0, %c0_0] : memref<128x32xf32, #tpu.memory_space<vmem>>, vector<128x32xf32>
    %1 = arith.mulf %0, %0 : vector<128x32xf32>
    %cst = arith.constant dense<0.000000e+00> : vector<128xf32>
    %2 = vector.multi_reduction <add>, %1, %cst [1] : vector<128x32xf32> to vector<128xf32>
    %3 = vector.shape_cast %2 : vector<128xf32> to vector<128x1xf32>
    %4 = math.sqrt %3 : vector<128x1xf32>
    %cst_1 = arith.constant 9.99999974E-5 : f32
    %5 = vector.broadcast %cst_1 : f32 to vector<128x1xf32>
    %6 = arith.addf %4, %5 : vector<128x1xf32>
    %7 = tpu.reciprocal %6 {approx = true} : vector<128x1xf32> -> vector<128x1xf32>
    %8 = vector.broadcast %7 : vector<128x1xf32> to vector<128x32xf32>
    %9 = arith.mulf %0, %8 : vector<128x32xf32>
    %10 = arith.truncf %9 : vector<128x32xf32> to vector<128x32xbf16>
    %c0_2 = arith.constant 0 : index
    %c0_3 = arith.constant 0 : index
    %11 = vector.load %arg2[%c0_2, %c0_3] : memref<32x64xbf16, #tpu.memory_space<vmem>>, vector<32x64xbf16>
    %cst_4 = arith.constant dense<0.000000e+00> : vector<128x64xf32>
    %12 = tpu.matmul %10, %11, %cst_4 {dimension_numbers = #tpu.dot_dimension_numbers<[1], [0], [0], [1], [0, 0, 1, 1], [], []>} : vector<128x32xbf16>, vector<32x64xbf16>, vector<128x64xf32> -> vector<128x64xf32>
    %c0_5 = arith.constant 0 : index
    %c0_6 = arith.constant 0 : index
    %13 = vector.load %arg3[%c0_5, %c0_6] : memref<1x64xf32, #tpu.memory_space<vmem>>, vector<1x64xf32>
    %14 = vector.broadcast %13 : vector<1x64xf32> to vector<128x64xf32>
    %15 = arith.addf %12, %14 : vector<128x64xf32>
    %cst_7 = arith.constant 0.000000e+00 : f32
    %16 = vector.broadcast %cst_7 : f32 to vector<128x64xf32>
    %17 = arith.maximumf %15, %16 : vector<128x64xf32>
    %18 = arith.mulf %17, %17 : vector<128x64xf32>
    %cst_8 = arith.constant dense<0.000000e+00> : vector<128xf32>
    %19 = vector.multi_reduction <add>, %18, %cst_8 [1] : vector<128x64xf32> to vector<128xf32>
    %20 = vector.shape_cast %19 : vector<128xf32> to vector<128x1xf32>
    %21 = math.sqrt %20 : vector<128x1xf32>
    %cst_9 = arith.constant 9.99999974E-5 : f32
    %22 = vector.broadcast %cst_9 : f32 to vector<128x1xf32>
    %23 = arith.addf %21, %22 : vector<128x1xf32>
    %24 = tpu.reciprocal %23 {approx = true} : vector<128x1xf32> -> vector<128x1xf32>
    %25 = vector.broadcast %24 : vector<128x1xf32> to vector<128x64xf32>
    %26 = arith.mulf %17, %25 : vector<128x64xf32>
    %27 = arith.truncf %26 : vector<128x64xf32> to vector<128x64xbf16>
    %c0_10 = arith.constant 0 : index
    %c0_11 = arith.constant 0 : index
    %28 = vector.load %arg4[%c0_10, %c0_11] : memref<64x64xbf16, #tpu.memory_space<vmem>>, vector<64x64xbf16>
    %cst_12 = arith.constant dense<0.000000e+00> : vector<128x64xf32>
    %29 = tpu.matmul %27, %28, %cst_12 {dimension_numbers = #tpu.dot_dimension_numbers<[1], [0], [0], [1], [0, 0, 1, 1], [], []>} : vector<128x64xbf16>, vector<64x64xbf16>, vector<128x64xf32> -> vector<128x64xf32>
    %c0_13 = arith.constant 0 : index
    %c0_14 = arith.constant 0 : index
    %30 = vector.load %arg5[%c0_13, %c0_14] : memref<1x64xf32, #tpu.memory_space<vmem>>, vector<1x64xf32>
    %31 = vector.broadcast %30 : vector<1x64xf32> to vector<128x64xf32>
    %32 = arith.addf %29, %31 : vector<128x64xf32>
    %cst_15 = arith.constant 0.000000e+00 : f32
    %33 = vector.broadcast %cst_15 : f32 to vector<128x64xf32>
    %34 = arith.maximumf %32, %33 : vector<128x64xf32>
    %35 = arith.truncf %17 : vector<128x64xf32> to vector<128x64xbf16>
    %c0_16 = arith.constant 0 : index
    %c0_17 = arith.constant 0 : index
    %36 = vector.load %arg6[%c0_16, %c0_17] : memref<64x128xbf16, #tpu.memory_space<vmem>>, vector<64x128xbf16>
    %cst_18 = arith.constant dense<0.000000e+00> : vector<128x128xf32>
    %37 = tpu.matmul %35, %36, %cst_18 {dimension_numbers = #tpu.dot_dimension_numbers<[1], [0], [0], [1], [0, 0, 1, 1], [], []>} : vector<128x64xbf16>, vector<64x128xbf16>, vector<128x128xf32> -> vector<128x128xf32>
    %38 = arith.truncf %34 : vector<128x64xf32> to vector<128x64xbf16>
    %c0_19 = arith.constant 0 : index
    %c0_20 = arith.constant 0 : index
    %39 = vector.load %arg7[%c0_19, %c0_20] : memref<64x128xbf16, #tpu.memory_space<vmem>>, vector<64x128xbf16>
    %cst_21 = arith.constant dense<0.000000e+00> : vector<128x128xf32>
    %40 = tpu.matmul %38, %39, %cst_21 {dimension_numbers = #tpu.dot_dimension_numbers<[1], [0], [0], [1], [0, 0, 1, 1], [], []>} : vector<128x64xbf16>, vector<64x128xbf16>, vector<128x128xf32> -> vector<128x128xf32>
    %41 = arith.addf %37, %40 : vector<128x128xf32>
    %c0_22 = arith.constant 0 : index
    %c0_23 = arith.constant 0 : index
    %42 = vector.load %arg8[%c0_22, %c0_23] : memref<1x128xf32, #tpu.memory_space<vmem>>, vector<1x128xf32>
    %43 = vector.broadcast %42 : vector<1x128xf32> to vector<128x128xf32>
    %44 = arith.addf %41, %43 : vector<128x128xf32>
    %cst_24 = arith.constant 0.000000e+00 : f32
    %45 = vector.broadcast %cst_24 : f32 to vector<128x128xf32>
    %46 = arith.maximumf %44, %45 : vector<128x128xf32>
    %c0_25 = arith.constant 0 : index
    %c0_26 = arith.constant 0 : index
    %47 = vector.load %arg9[%c0_25, %c0_26] : memref<128x128xf32, #tpu.memory_space<vmem>>, vector<128x128xf32>
    tpu.vector_store %arg9[%c0_25, %c0_26], %46 {strides = array<i32>} : memref<128x128xf32, #tpu.memory_space<vmem>>, vector<128x128xf32>,
    return
  }
  func.func @transform_0(%arg0: i32) -> (i32, i32) {
    %c0_i32 = arith.constant 0 : i32
    %c0_i32_0 = arith.constant 0 : i32
    return %arg0, %c0_i32 : i32, i32
  }
  func.func @transform_1(%arg0: i32) -> (i32, i32) {
    %c0_i32 = arith.constant 0 : i32
    %c0_i32_0 = arith.constant 0 : i32
    %c0_i32_1 = arith.constant 0 : i32
    return %c0_i32, %c0_i32_0 : i32, i32
  }
  func.func @transform_2(%arg0: i32) -> (i32, i32) {
    %c0_i32 = arith.constant 0 : i32
    %c0_i32_0 = arith.constant 0 : i32
    %c0_i32_1 = arith.constant 0 : i32
    return %c0_i32, %c0_i32_0 : i32, i32
  }
  func.func @transform_3(%arg0: i32) -> (i32, i32) {
    %c0_i32 = arith.constant 0 : i32
    %c0_i32_0 = arith.constant 0 : i32
    %c0_i32_1 = arith.constant 0 : i32
    return %c0_i32, %c0_i32_0 : i32, i32
  }
  func.func @transform_4(%arg0: i32) -> (i32, i32) {
    %c0_i32 = arith.constant 0 : i32
    %c0_i32_0 = arith.constant 0 : i32
    %c0_i32_1 = arith.constant 0 : i32
    return %c0_i32, %c0_i32_0 : i32, i32
  }
  func.func @transform_5(%arg0: i32) -> (i32, i32) {
    %c0_i32 = arith.constant 0 : i32
    %c0_i32_0 = arith.constant 0 : i32
    %c0_i32_1 = arith.constant 0 : i32
    return %c0_i32, %c0_i32_0 : i32, i32
  }
  func.func @transform_6(%arg0: i32) -> (i32, i32) {
    %c0_i32 = arith.constant 0 : i32
    %c0_i32_0 = arith.constant 0 : i32
    %c0_i32_1 = arith.constant 0 : i32
    return %c0_i32, %c0_i32_0 : i32, i32
  }
  func.func @transform_7(%arg0: i32) -> (i32, i32) {
    %c0_i32 = arith.constant 0 : i32
    %c0_i32_0 = arith.constant 0 : i32
    %c0_i32_1 = arith.constant 0 : i32
    return %c0_i32, %c0_i32_0 : i32, i32
  }
  func.func @transform_8(%arg0: i32) -> (i32, i32) {
    %c0_i32 = arith.constant 0 : i32
    %c0_i32_0 = arith.constant 0 : i32
    return %arg0, %c0_i32 : i32, i32
  }
}

</mosaic_0001>

<llo_original>
// kernel: tpu_custom_call.1
$region0: #{tpu_custom_call.1}
  #allocation0 [shape = 'u32[]', space=smem, size = 0x4, offset = 0x4, fixed_abs, tag = 'smem constant byte address 0x4 - core index']
  #allocation1 [shape = 'u32[144,128]{1,0:T(1,128)}', space=vmem, size = 0x12000, scoped, tag = 'internal scratch']
  %s0 = inlined_call_operand.vmem [shape: f32[256,32], index: 0, kind: input, shape index: {}]
  %s1 = inlined_call_operand.vmem [shape: bf16[32,64], index: 1, kind: input, shape index: {}]
  %s2 = inlined_call_operand.vmem [shape: f32[1,64], index: 2, kind: input, shape index: {}]
  %s3 = inlined_call_operand.vmem [shape: bf16[64,64], index: 3, kind: input, shape index: {}]
  %s4 = inlined_call_operand.vmem [shape: f32[1,64], index: 4, kind: input, shape index: {}]
  %s5 = inlined_call_operand.vmem [shape: bf16[64,128], index: 5, kind: input, shape index: {}]
  %s6 = inlined_call_operand.vmem [shape: bf16[64,128], index: 6, kind: input, shape index: {}]
  %s7 = inlined_call_operand.vmem [shape: f32[1,128], index: 7, kind: input, shape index: {}]
  %s8 = inlined_call_operand.hbm [shape: f32[256,128], index: 8, kind: output, shape index: {}]
  %s9 = sld [smem:[#allocation0]]
  $region65: #{tpu_custom_call.1} parent=0
    _
  %s11 = ssub.s32 1, %s9
  %s12 = scalar_select 0, %s11, %s9
  $region1: #{tpu_custom_call.1} parent=0
    #allocation2 [shape = 'u8[131072]{0}', space=vmem, size = 0x20000, scoped, tag = 'output window, operand 0']
    #allocation3 [shape = 's32[2]{0}', space=sflag, size = 0x8, scoped, tag = 'scoped memory for tpu_custom_call.1']
    %13 = vsyncpa [#allocation3], 0
    %s14 = scalar_lea.sflag [#allocation3], 1
    %15 = vsyncpa %s14, 0
    loop: start=0, step=1, limit=4
    $region2: #{tpu_custom_call.1} parent=1 // loop_pre_header
      _
    $region3: #{tpu_custom_call.1} parent=1 // loop_header
      %s17 = sphi 0, %s21
      %p18 = scmp.ge.s32.totalorder %s17, 4
      %s27 = sphi 0, %s29
      %s30 = sphi 0, %s27
      %s31 = sphi 0, %s30
      %s47 = sphi 0, %s31
      %s51 = sphi 0, %s51
      %s53 = sphi 0, %s51
      %s54 = sphi 0, %s53
      %s68 = sphi 0, %s54
      %s72 = sphi 0, %s72
      %s74 = sphi 0, %s72
      %s75 = sphi 0, %s74
      %s89 = sphi 0, %s75
      %s93 = sphi 0, %s93
      %s95 = sphi 0, %s93
      %s96 = sphi 0, %s95
      %s110 = sphi 0, %s96
      %s114 = sphi 0, %s114
      %s116 = sphi 0, %s114
      %s117 = sphi 0, %s116
      %s131 = sphi 0, %s117
      %s135 = sphi 0, %s135
      %s137 = sphi 0, %s135
      %s138 = sphi 0, %s137
      %s152 = sphi 0, %s138
      %s156 = sphi 0, %s156
      %s158 = sphi 0, %s156
      %s159 = sphi 0, %s158
      %s173 = sphi 0, %s159
      %s177 = sphi 0, %s177
      %s179 = sphi 0, %s177
      %s180 = sphi 0, %s179
      %s194 = sphi 0, %s180
      %s200 = sphi 0, %s202
      %s203 = sphi 0, %s200
      %s204 = sphi 0, %s203
      %s220 = sphi 0, %s204
    $region4: #{tpu_custom_call.1} parent=1 // loop_header_branch
      %20 = sbr.rel (%p18) target = $region8
    $region5: #{tpu_custom_call.1} parent=1 // loop_body
      %s22 = ssub.s32 %s17, 1
      %s23 = ssub.s32 %s17, 2
      %s24 = sadd.s32 %s17, 1
      %s25 = ssub.s32 %s17, %s24
      %p26 = scmp.eq.s32.totalorder %s25, 0
      %s28 = sadd.s32 %s27, 1
      %s29 = scalar_select %p26, %s27, %s28
      %p32 = pneg %p26
      %p33 = scmp.eq.s32.totalorder %s17, 1
      %p34 = por %p32, %p33
      %p35 = scmp.ne.s32.totalorder %s27, %s30
      %p36 = scmp.eq.s32.totalorder %s17, 0
      %p37 = por %p35, %p36
      %p38 = scmp.ne.s32.totalorder %s27, %s30
      %p39 = scmp.eq.s32.totalorder %s22, 1
      %p40 = por %p38, %p39
      %p41 = scmp.ne.s32.totalorder %s30, %s31
      %p42 = scmp.eq.s32.totalorder %s22, 0
      %p43 = por %p41, %p42
      %p44 = scmp.ne.s32.totalorder %s30, %s31
      %p45 = scmp.eq.s32.totalorder %s23, 1
      %p46 = por %p44, %p45
      %p48 = scmp.ne.s32.totalorder %s31, %s47
      %p49 = scmp.eq.s32.totalorder %s23, 0
      %p50 = por %p48, %p49
      %s52 = sadd.s32 %s51, 1
      %p55 = scmp.eq.s32.totalorder %s17, 1
      %p56 = scmp.ne.s32.totalorder %s51, %s53
      %p57 = scmp.eq.s32.totalorder %s17, 0
      %p58 = por %p56, %p57
      %p59 = scmp.ne.s32.totalorder %s51, %s53
      %p60 = scmp.eq.s32.totalorder %s22, 1
      %p61 = por %p59, %p60
      %p62 = scmp.ne.s32.totalorder %s53, %s54
      %p63 = scmp.eq.s32.totalorder %s22, 0
      %p64 = por %p62, %p63
      %p65 = scmp.ne.s32.totalorder %s53, %s54
      %p66 = scmp.eq.s32.totalorder %s23, 1
      %p67 = por %p65, %p66
      %p69 = scmp.ne.s32.totalorder %s54, %s68
      %p70 = scmp.eq.s32.totalorder %s23, 0
      %p71 = por %p69, %p70
      %s73 = sadd.s32 %s72, 1
      %p76 = scmp.eq.s32.totalorder %s17, 1
      %p77 = scmp.ne.s32.totalorder %s72, %s74
      %p78 = scmp.eq.s32.totalorder %s17, 0
      %p79 = por %p77, %p78
      %p80 = scmp.ne.s32.totalorder %s72, %s74
      %p81 = scmp.eq.s32.totalorder %s22, 1
      %p82 = por %p80, %p81
      %p83 = scmp.ne.s32.totalorder %s74, %s75
      %p84 = scmp.eq.s32.totalorder %s22, 0
      %p85 = por %p83, %p84
      %p86 = scmp.ne.s32.totalorder %s74, %s75
      %p87 = scmp.eq.s32.totalorder %s23, 1
      %p88 = por %p86, %p87
      %p90 = scmp.ne.s32.totalorder %s75, %s89
      %p91 = scmp.eq.s32.totalorder %s23, 0
      %p92 = por %p90, %p91
      %s94 = sadd.s32 %s93, 1
      %p97 = scmp.eq.s32.totalorder %s17, 1
      %p98 = scmp.ne.s32.totalorder %s93, %s95
      %p99 = scmp.eq.s32.totalorder %s17, 0
      %p100 = por %p98, %p99
      %p101 = scmp.ne.s32.totalorder %s93, %s95
      %p102 = scmp.eq.s32.totalorder %s22, 1
      %p103 = por %p101, %p102
      %p104 = scmp.ne.s32.totalorder %s95, %s96
      %p105 = scmp.eq.s32.totalorder %s22, 0
      %p106 = por %p104, %p105
      %p107 = scmp.ne.s32.totalorder %s95, %s96
      %p108 = scmp.eq.s32.totalorder %s23, 1
      %p109 = por %p107, %p108
      %p111 = scmp.ne.s32.totalorder %s96, %s110
      %p112 = scmp.eq.s32.totalorder %s23, 0
      %p113 = por %p111, %p112
      %s115 = sadd.s32 %s114, 1
      %p118 = scmp.eq.s32.totalorder %s17, 1
      %p119 = scmp.ne.s32.totalorder %s114, %s116
      %p120 = scmp.eq.s32.totalorder %s17, 0
      %p121 = por %p119, %p120
      %p122 = scmp.ne.s32.totalorder %s114, %s116
      %p123 = scmp.eq.s32.totalorder %s22, 1
      %p124 = por %p122, %p123
      %p125 = scmp.ne.s32.totalorder %s116, %s117
      %p126 = scmp.eq.s32.totalorder %s22, 0
      %p127 = por %p125, %p126
      %p128 = scmp.ne.s32.totalorder %s116, %s117
      %p129 = scmp.eq.s32.totalorder %s23, 1
      %p130 = por %p128, %p129
      %p132 = scmp.ne.s32.totalorder %s117, %s131
      %p133 = scmp.eq.s32.totalorder %s23, 0
      %p134 = por %p132, %p133
      %s136 = sadd.s32 %s135, 1
      %p139 = scmp.eq.s32.totalorder %s17, 1
      %p140 = scmp.ne.s32.totalorder %s135, %s137
      %p141 = scmp.eq.s32.totalorder %s17, 0
      %p142 = por %p140, %p141
      %p143 = scmp.ne.s32.totalorder %s135, %s137
      %p144 = scmp.eq.s32.totalorder %s22, 1
      %p145 = por %p143, %p144
      %p146 = scmp.ne.s32.totalorder %s137, %s138
      %p147 = scmp.eq.s32.totalorder %s22, 0
      %p148 = por %p146, %p147
      %p149 = scmp.ne.s32.totalorder %s137, %s138
      %p150 = scmp.eq.s32.totalorder %s23, 1
      %p151 = por %p149, %p150
      %p153 = scmp.ne.s32.totalorder %s138, %s152
      %p154 = scmp.eq.s32.totalorder %s23, 0
      %p155 = por %p153, %p154
      %s157 = sadd.s32 %s156, 1
      %p160 = scmp.eq.s32.totalorder %s17, 1
      %p161 = scmp.ne.s32.totalorder %s156, %s158
      %p162 = scmp.eq.s32.totalorder %s17, 0
      %p163 = por %p161, %p162
      %p164 = scmp.ne.s32.totalorder %s156, %s158
      %p165 = scmp.eq.s32.totalorder %s22, 1
      %p166 = por %p164, %p165
      %p167 = scmp.ne.s32.totalorder %s158, %s159
      %p168 = scmp.eq.s32.totalorder %s22, 0
      %p169 = por %p167, %p168
      %p170 = scmp.ne.s32.totalorder %s158, %s159
      %p171 = scmp.eq.s32.totalorder %s23, 1
      %p172 = por %p170, %p171
      %p174 = scmp.ne.s32.totalorder %s159, %s173
      %p175 = scmp.eq.s32.totalorder %s23, 0
      %p176 = por %p174, %p175
      %s178 = sadd.s32 %s177, 1
      %p181 = scmp.eq.s32.totalorder %s17, 1
      %p182 = scmp.ne.s32.totalorder %s177, %s179
      %p183 = scmp.eq.s32.totalorder %s17, 0
      %p184 = por %p182, %p183
      %p185 = scmp.ne.s32.totalorder %s177, %s179
      %p186 = scmp.eq.s32.totalorder %s22, 1
      %p187 = por %p185, %p186
      %p188 = scmp.ne.s32.totalorder %s179, %s180
      %p189 = scmp.eq.s32.totalorder %s22, 0
      %p190 = por %p188, %p189
      %p191 = scmp.ne.s32.totalorder %s179, %s180
      %p192 = scmp.eq.s32.totalorder %s23, 1
      %p193 = por %p191, %p192
      %p195 = scmp.ne.s32.totalorder %s180, %s194
      %p196 = scmp.eq.s32.totalorder %s23, 0
      %p197 = por %p195, %p196
      %s198 = ssub.s32 %s17, %s24
      %p199 = scmp.eq.s32.totalorder %s198, 0
      %s201 = sadd.s32 %s200, 1
      %s202 = scalar_select %p199, %s200, %s201
      %p205 = pneg %p199
      %p206 = scmp.eq.s32.totalorder %s17, 1
      %p207 = por %p205, %p206
      %p208 = scmp.ne.s32.totalorder %s200, %s203
      %p209 = scmp.eq.s32.totalorder %s17, 0
      %p210 = por %p208, %p209
      %p211 = scmp.ne.s32.totalorder %s200, %s203
      %p212 = scmp.eq.s32.totalorder %s22, 1
      %p213 = por %p211, %p212
      %p214 = scmp.ne.s32.totalorder %s203, %s204
      %p215 = scmp.eq.s32.totalorder %s22, 0
      %p216 = por %p214, %p215
      %p217 = scmp.ne.s32.totalorder %s203, %s204
      %p218 = scmp.eq.s32.totalorder %s23, 1
      %p219 = por %p217, %p218
      %p221 = scmp.ne.s32.totalorder %s204, %s220
      %p222 = scmp.eq.s32.totalorder %s23, 0
      %p223 = por %p221, %p222
      %p224 = scmp.le.s32.totalorder 1, %s17
      %p225 = scmp.lt.s32.totalorder %s17, 3
      %p226 = pnand %p224, %p225
      %p227 = pneg %p226
      // Predicated region
      $region9: #{tpu_custom_call.1} parent=5 // pred_check
        _
      $region10: #{tpu_custom_call.1} parent=5 // pred_check_branch
        %229 = sbr.rel (%p226) target = $region12
      $region11: #{tpu_custom_call.1} parent=5 // pred_region
        %s230 = ssub.s32 %s17, 1
        // Predicated region
        $region13: #{tpu_custom_call.1} parent=11 // pred_check
          %p231 = pneg %p64
        $region14: #{tpu_custom_call.1} parent=11 // pred_check_branch
          %233 = sbr.rel (%p231) target = $region16
        $region15: #{tpu_custom_call.1} parent=11 // pred_region
          _
        $region16: #{tpu_custom_call.1} parent=11 // pred_fallthru
          _
        // Predicated region
        $region17: #{tpu_custom_call.1} parent=11 // pred_check
          %p234 = pneg %p85
        $region18: #{tpu_custom_call.1} parent=11 // pred_check_branch
          %236 = sbr.rel (%p234) target = $region20
        $region19: #{tpu_custom_call.1} parent=11 // pred_region
          _
        $region20: #{tpu_custom_call.1} parent=11 // pred_fallthru
          _
        // Predicated region
        $region21: #{tpu_custom_call.1} parent=11 // pred_check
          %p237 = pneg %p106
        $region22: #{tpu_custom_call.1} parent=11 // pred_check_branch
          %239 = sbr.rel (%p237) target = $region24
        $region23: #{tpu_custom_call.1} parent=11 // pred_region
          _
        $region24: #{tpu_custom_call.1} parent=11 // pred_fallthru
          _
        // Predicated region
        $region25: #{tpu_custom_call.1} parent=11 // pred_check
          %p240 = pneg %p127
        $region26: #{tpu_custom_call.1} parent=11 // pred_check_branch
          %242 = sbr.rel (%p240) target = $region28
        $region27: #{tpu_custom_call.1} parent=11 // pred_region
          _
        $region28: #{tpu_custom_call.1} parent=11 // pred_fallthru
          _
        // Predicated region
        $region29: #{tpu_custom_call.1} parent=11 // pred_check
          %p243 = pneg %p148
        $region30: #{tpu_custom_call.1} parent=11 // pred_check_branch
          %245 = sbr.rel (%p243) target = $region32
        $region31: #{tpu_custom_call.1} parent=11 // pred_region
          _
        $region32: #{tpu_custom_call.1} parent=11 // pred_fallthru
          _
        // Predicated region
        $region33: #{tpu_custom_call.1} parent=11 // pred_check
          %p246 = pneg %p169
        $region34: #{tpu_custom_call.1} parent=11 // pred_check_branch
          %248 = sbr.rel (%p246) target = $region36
        $region35: #{tpu_custom_call.1} parent=11 // pred_region
          _
        $region36: #{tpu_custom_call.1} parent=11 // pred_fallthru
          _
        // Predicated region
        $region37: #{tpu_custom_call.1} parent=11 // pred_check
          %p249 = pneg %p190
        $region38: #{tpu_custom_call.1} parent=11 // pred_check_branch
          %251 = sbr.rel (%p249) target = $region40
        $region39: #{tpu_custom_call.1} parent=11 // pred_region
          _
        $region40: #{tpu_custom_call.1} parent=11 // pred_fallthru
          _
      $region12: #{tpu_custom_call.1} parent=5 // pred_fallthru
        _
      %p252 = scmp.lt.s32.totalorder %s17, 2
      // Predicated region
      $region41: #{tpu_custom_call.1} parent=5 // pred_check
        %p253 = pneg %p252
      $region42: #{tpu_custom_call.1} parent=5 // pred_check_branch
        %255 = sbr.rel (%p253) target = $region44
      $region43: #{tpu_custom_call.1} parent=5 // pred_region
        // Predicated region
        $region45: #{tpu_custom_call.1} parent=43 // pred_check
          %p256 = pneg %p37
        $region46: #{tpu_custom_call.1} parent=43 // pred_check_branch
          %258 = sbr.rel (%p256) target = $region48
        $region47: #{tpu_custom_call.1} parent=43 // pred_region
          %s259 = smul.u32 16, %s17
          %p260 = scmp.lt.s32.totalorder %s259, 31
          %s261 = scalar_select %p260, %s259, 31
          %s262 = smul.addr %s261, 8
          %s263 = scalar_lea.vmem %s0, %s262
          %s264 = smul.u32 16, %s17
        $region48: #{tpu_custom_call.1} parent=43 // pred_fallthru
          _
      $region44: #{tpu_custom_call.1} parent=5 // pred_fallthru
        _
      %p265 = scmp.le.s32.totalorder 1, %s17
      %p266 = scmp.lt.s32.totalorder %s17, 3
      %p267 = pnand %p265, %p266
      %p268 = pneg %p267
      // Predicated region
      $region49: #{tpu_custom_call.1} parent=5 // pred_check
        _
      $region50: #{tpu_custom_call.1} parent=5 // pred_check_branch
        %270 = sbr.rel (%p267) target = $region52
      $region51: #{tpu_custom_call.1} parent=5 // pred_region
        %s271 = ssub.s32 %s17, 1
        %s272 = smul.u32 16, %s22
        %p273 = scmp.lt.s32.totalorder %s272, 31
        %s274 = scalar_select %p273, %s272, 31
        %s275 = smul.addr %s274, 8
        %s276 = scalar_lea.vmem %s0, %s275
        %p277 = pneg %p43
        %p278 = pneg %p40
        %p279 = pneg %p64
        %p280 = pneg %p61
        %p281 = pneg %p85
        %p282 = pneg %p82
        %p283 = pneg %p106
        %p284 = pneg %p103
        %p285 = pneg %p127
        %p286 = pneg %p124
        %p287 = pneg %p148
        %p288 = pneg %p145
        %p289 = pneg %p169
        %p290 = pneg %p166
        %p291 = pneg %p190
        %p292 = pneg %p187
        %p293 = pneg %p216
        %p294 = pneg %p213
        %s295 = sand.u32 %s203, 1
        %s296 = scalar_lea.sflag [#allocation3], %s295
        %s297 = sand.u32 %s203, 1
        %s298 = smul.addr %s297, 128
        %s299 = scalar_lea.vmem [#allocation2], %s298
        %s300 = smul.u32 16, %s22
        %p301 = scmp.lt.s32.totalorder %s300, 31
        %s302 = scalar_select %p301, %s300, 31
        %s303 = smul.addr %s302, 8
        %s304 = scalar_lea.vmem %s0, %s303
        %s305 = smul.u32 16, %s22
        %s306 = smul.u32 16, %s22
        %v308 = vld [vmem:[%s304] sm:$0xff]
        %v309 = vld [vmem:[%s304 + $0x8] sm:$0xff]
        %v310 = vld [vmem:[%s304 + $0x10] sm:$0xff]
        %v311 = vld [vmem:[%s304 + $0x18] sm:$0xff]
        %v312 = vld [vmem:[%s304 + $0x20] sm:$0xff]
        %v313 = vld [vmem:[%s304 + $0x28] sm:$0xff]
        %v314 = vld [vmem:[%s304 + $0x30] sm:$0xff]
        %v315 = vld [vmem:[%s304 + $0x38] sm:$0xff]
        %v316 = vld [vmem:[%s304 + $0x40] sm:$0xff]
        %v317 = vld [vmem:[%s304 + $0x48] sm:$0xff]
        %v318 = vld [vmem:[%s304 + $0x50] sm:$0xff]
        %v319 = vld [vmem:[%s304 + $0x58] sm:$0xff]
        %v320 = vld [vmem:[%s304 + $0x60] sm:$0xff]
        %v321 = vld [vmem:[%s304 + $0x68] sm:$0xff]
        %v322 = vld [vmem:[%s304 + $0x70] sm:$0xff]
        %v323 = vld [vmem:[%s304 + $0x78] sm:$0xff]
        %v324 = vmul.f32 %v308, %v308
        %v325 = vmul.f32 %v309, %v309
        %v326 = vmul.f32 %v310, %v310
        %v327 = vmul.f32 %v311, %v311
        %v328 = vmul.f32 %v312, %v312
        %v329 = vmul.f32 %v313, %v313
        %v330 = vmul.f32 %v314, %v314
        %v331 = vmul.f32 %v315, %v315
        %v332 = vmul.f32 %v316, %v316
        %v333 = vmul.f32 %v317, %v317
        %v334 = vmul.f32 %v318, %v318
        %v335 = vmul.f32 %v319, %v319
        %v336 = vmul.f32 %v320, %v320
        %v337 = vmul.f32 %v321, %v321
        %v338 = vmul.f32 %v322, %v322
        %v339 = vmul.f32 %v323, %v323
        %vm340 = vcmask 261120
        %v341 = vsel %vm340, %v324, 0.0
        %342 = vadd.xlane.f32.xlu0 %v341
        %v343 = vpop.xlane.xlu0 %342
        %v344 = vsel %vm340, %v325, 0.0
        %345 = vadd.xlane.f32.xlu0 %v344
        %v346 = vpop.xlane.xlu0 %345
        %v347 = vsel %vm340, %v326, 0.0
        %348 = vadd.xlane.f32.xlu0 %v347
        %v349 = vpop.xlane.xlu0 %348
        %v350 = vsel %vm340, %v327, 0.0
        %351 = vadd.xlane.f32.xlu0 %v350
        %v352 = vpop.xlane.xlu0 %351
        %v353 = vsel %vm340, %v328, 0.0
        %354 = vadd.xlane.f32.xlu0 %v353
        %v355 = vpop.xlane.xlu0 %354
        %v356 = vsel %vm340, %v329, 0.0
        %357 = vadd.xlane.f32.xlu0 %v356
        %v358 = vpop.xlane.xlu0 %357
        %v359 = vsel %vm340, %v330, 0.0
        %360 = vadd.xlane.f32.xlu0 %v359
        %v361 = vpop.xlane.xlu0 %360
        %v362 = vsel %vm340, %v331, 0.0
        %363 = vadd.xlane.f32.xlu0 %v362
        %v364 = vpop.xlane.xlu0 %363
        %v365 = vsel %vm340, %v332, 0.0
        %366 = vadd.xlane.f32.xlu0 %v365
        %v367 = vpop.xlane.xlu0 %366
        %v368 = vsel %vm340, %v333, 0.0
        %369 = vadd.xlane.f32.xlu0 %v368
        %v370 = vpop.xlane.xlu0 %369
        %v371 = vsel %vm340, %v334, 0.0
        %372 = vadd.xlane.f32.xlu0 %v371
        %v373 = vpop.xlane.xlu0 %372
        %v374 = vsel %vm340, %v335, 0.0
        %375 = vadd.xlane.f32.xlu0 %v374
        %v376 = vpop.xlane.xlu0 %375
        %v377 = vsel %vm340, %v336, 0.0
        %378 = vadd.xlane.f32.xlu0 %v377
        %v379 = vpop.xlane.xlu0 %378
        %v380 = vsel %vm340, %v337, 0.0
        %381 = vadd.xlane.f32.xlu0 %v380
        %v382 = vpop.xlane.xlu0 %381
        %v383 = vsel %vm340, %v338, 0.0
        %384 = vadd.xlane.f32.xlu0 %v383
        %v385 = vpop.xlane.xlu0 %384
        %v386 = vsel %vm340, %v339, 0.0
        %387 = vadd.xlane.f32.xlu0 %v386
        %v388 = vpop.xlane.xlu0 %387
        %v389 = vrsqrt.pop %v343
        %v390 = vmul.f32 %v343, %v389
        %vm391 = vcmp.eq.f32.partialorder %v343, inf
        %v392 = vsel %vm391, %v343, %v390
        %vm393 = vcmp.eq.f32.partialorder %v343, 0.0
        %v394 = vand.u32 %v343, 2147483648
        %v395 = vsel %vm393, %v394, %v392
        %v396 = vrsqrt.pop %v346
        %v397 = vmul.f32 %v346, %v396
        %vm398 = vcmp.eq.f32.partialorder %v346, inf
        %v399 = vsel %vm398, %v346, %v397
        %vm400 = vcmp.eq.f32.partialorder %v346, 0.0
        %v401 = vand.u32 %v346, 2147483648
        %v402 = vsel %vm400, %v401, %v399
        %v403 = vrsqrt.pop %v349
        %v404 = vmul.f32 %v349, %v403
        %vm405 = vcmp.eq.f32.partialorder %v349, inf
        %v406 = vsel %vm405, %v349, %v404
        %vm407 = vcmp.eq.f32.partialorder %v349, 0.0
        %v408 = vand.u32 %v349, 2147483648
        %v409 = vsel %vm407, %v408, %v406
        %v410 = vrsqrt.pop %v352
        %v411 = vmul.f32 %v352, %v410
        %vm412 = vcmp.eq.f32.partialorder %v352, inf
        %v413 = vsel %vm412, %v352, %v411
        %vm414 = vcmp.eq.f32.partialorder %v352, 0.0
        %v415 = vand.u32 %v352, 2147483648
        %v416 = vsel %vm414, %v415, %v413
        %v417 = vrsqrt.pop %v355
        %v418 = vmul.f32 %v355, %v417
        %vm419 = vcmp.eq.f32.partialorder %v355, inf
        %v420 = vsel %vm419, %v355, %v418
        %vm421 = vcmp.eq.f32.partialorder %v355, 0.0
        %v422 = vand.u32 %v355, 2147483648
        %v423 = vsel %vm421, %v422, %v420
        %v424 = vrsqrt.pop %v358
        %v425 = vmul.f32 %v358, %v424
        %vm426 = vcmp.eq.f32.partialorder %v358, inf
        %v427 = vsel %vm426, %v358, %v425
        %vm428 = vcmp.eq.f32.partialorder %v358, 0.0
        %v429 = vand.u32 %v358, 2147483648
        %v430 = vsel %vm428, %v429, %v427
        %v431 = vrsqrt.pop %v361
        %v432 = vmul.f32 %v361, %v431
        %vm433 = vcmp.eq.f32.partialorder %v361, inf
        %v434 = vsel %vm433, %v361, %v432
        %vm435 = vcmp.eq.f32.partialorder %v361, 0.0
        %v436 = vand.u32 %v361, 2147483648
        %v437 = vsel %vm435, %v436, %v434
        %v438 = vrsqrt.pop %v364
        %v439 = vmul.f32 %v364, %v438
        %vm440 = vcmp.eq.f32.partialorder %v364, inf
        %v441 = vsel %vm440, %v364, %v439
        %vm442 = vcmp.eq.f32.partialorder %v364, 0.0
        %v443 = vand.u32 %v364, 2147483648
        %v444 = vsel %vm442, %v443, %v441
        %v445 = vrsqrt.pop %v367
        %v446 = vmul.f32 %v367, %v445
        %vm447 = vcmp.eq.f32.partialorder %v367, inf
        %v448 = vsel %vm447, %v367, %v446
        %vm449 = vcmp.eq.f32.partialorder %v367, 0.0
        %v450 = vand.u32 %v367, 2147483648
        %v451 = vsel %vm449, %v450, %v448
        %v452 = vrsqrt.pop %v370
        %v453 = vmul.f32 %v370, %v452
        %vm454 = vcmp.eq.f32.partialorder %v370, inf
        %v455 = vsel %vm454, %v370, %v453
        %vm456 = vcmp.eq.f32.partialorder %v370, 0.0
        %v457 = vand.u32 %v370, 2147483648
        %v458 = vsel %vm456, %v457, %v455
        %v459 = vrsqrt.pop %v373
        %v460 = vmul.f32 %v373, %v459
        %vm461 = vcmp.eq.f32.partialorder %v373, inf
        %v462 = vsel %vm461, %v373, %v460
        %vm463 = vcmp.eq.f32.partialorder %v373, 0.0
        %v464 = vand.u32 %v373, 2147483648
        %v465 = vsel %vm463, %v464, %v462
        %v466 = vrsqrt.pop %v376
        %v467 = vmul.f32 %v376, %v466
        %vm468 = vcmp.eq.f32.partialorder %v376, inf
        %v469 = vsel %vm468, %v376, %v467
        %vm470 = vcmp.eq.f32.partialorder %v376, 0.0
        %v471 = vand.u32 %v376, 2147483648
        %v472 = vsel %vm470, %v471, %v469
        %v473 = vrsqrt.pop %v379
        %v474 = vmul.f32 %v379, %v473
        %vm475 = vcmp.eq.f32.partialorder %v379, inf
        %v476 = vsel %vm475, %v379, %v474
        %vm477 = vcmp.eq.f32.partialorder %v379, 0.0
        %v478 = vand.u32 %v379, 2147483648
        %v479 = vsel %vm477, %v478, %v476
        %v480 = vrsqrt.pop %v382
        %v481 = vmul.f32 %v382, %v480
        %vm482 = vcmp.eq.f32.partialorder %v382, inf
        %v483 = vsel %vm482, %v382, %v481
        %vm484 = vcmp.eq.f32.partialorder %v382, 0.0
        %v485 = vand.u32 %v382, 2147483648
        %v486 = vsel %vm484, %v485, %v483
        %v487 = vrsqrt.pop %v385
        %v488 = vmul.f32 %v385, %v487
        %vm489 = vcmp.eq.f32.partialorder %v385, inf
        %v490 = vsel %vm489, %v385, %v488
        %vm491 = vcmp.eq.f32.partialorder %v385, 0.0
        %v492 = vand.u32 %v385, 2147483648
        %v493 = vsel %vm491, %v492, %v490
        %v494 = vrsqrt.pop %v388
        %v495 = vmul.f32 %v388, %v494
        %vm496 = vcmp.eq.f32.partialorder %v388, inf
        %v497 = vsel %vm496, %v388, %v495
        %vm498 = vcmp.eq.f32.partialorder %v388, 0.0
        %v499 = vand.u32 %v388, 2147483648
        %v500 = vsel %vm498, %v499, %v497
        %v501 = vadd.f32 %v395, 0.0001
        %v502 = vadd.f32 %v402, 0.0001
        %v503 = vadd.f32 %v409, 0.0001
        %v504 = vadd.f32 %v416, 0.0001
        %v505 = vadd.f32 %v423, 0.0001
        %v506 = vadd.f32 %v430, 0.0001
        %v507 = vadd.f32 %v437, 0.0001
        %v508 = vadd.f32 %v444, 0.0001
        %v509 = vadd.f32 %v451, 0.0001
        %v510 = vadd.f32 %v458, 0.0001
        %v511 = vadd.f32 %v465, 0.0001
        %v512 = vadd.f32 %v472, 0.0001
        %v513 = vadd.f32 %v479, 0.0001
        %v514 = vadd.f32 %v486, 0.0001
        %v515 = vadd.f32 %v493, 0.0001
        %v516 = vadd.f32 %v500, 0.0001
        %v517 = vrcp.pop %v501
        %v518 = vrcp.pop %v502
        %v519 = vrcp.pop %v503
        %v520 = vrcp.pop %v504
        %v521 = vrcp.pop %v505
        %v522 = vrcp.pop %v506
        %v523 = vrcp.pop %v507
        %v524 = vrcp.pop %v508
        %v525 = vrcp.pop %v509
        %v526 = vrcp.pop %v510
        %v527 = vrcp.pop %v511
        %v528 = vrcp.pop %v512
        %v529 = vrcp.pop %v513
        %v530 = vrcp.pop %v514
        %v531 = vrcp.pop %v515
        %v532 = vrcp.pop %v516
        %v533 = vmul.f32 %v308, %v517
        %v534 = vmul.f32 %v309, %v518
        %v535 = vmul.f32 %v310, %v519
        %v536 = vmul.f32 %v311, %v520
        %v537 = vmul.f32 %v312, %v521
        %v538 = vmul.f32 %v313, %v522
        %v539 = vmul.f32 %v314, %v523
        %v540 = vmul.f32 %v315, %v524
        %v541 = vmul.f32 %v316, %v525
        %v542 = vmul.f32 %v317, %v526
        %v543 = vmul.f32 %v318, %v527
        %v544 = vmul.f32 %v319, %v528
        %v545 = vmul.f32 %v320, %v529
        %v546 = vmul.f32 %v321, %v530
        %v547 = vmul.f32 %v322, %v531
        %v548 = vmul.f32 %v323, %v532
        %v549 = vpack.c.bf16 %v534, %v533
        %v550 = vpack.c.bf16 %v536, %v535
        %v551 = vpack.c.bf16 %v538, %v537
        %v552 = vpack.c.bf16 %v540, %v539
        %v553 = vpack.c.bf16 %v542, %v541
        %v554 = vpack.c.bf16 %v544, %v543
        %v555 = vpack.c.bf16 %v546, %v545
        %v556 = vpack.c.bf16 %v548, %v547
        %v557 = vld [vmem:[%s1] sm:$0xf]
        %v558 = vld [vmem:[%s1 + $0x4] sm:$0xf]
        %v559 = vld [vmem:[%s1 + $0x8] sm:$0xf]
        %v560 = vld [vmem:[%s1 + $0xc] sm:$0xf]
        %v561 = vld [vmem:[%s2] sm:$0x1]
        %v563 = vlaneseq
        %v564 = vshrl.u32 %v563, 7
        %v565 = vsub.s32 0, %v564
        %v566 = vrot.slane %v561, %v565
        %v572 = vunpack.c.l.b16 %v557
        %v573 = vunpack.c.l.b16 %v558
        %v574 = vunpack.c.l.b16 %v559
        %v575 = vunpack.c.l.b16 %v560
        %v576 = vpack.c.b16 %v573, %v572
        %v577 = vpack.c.b16 %v575, %v574
        %v581 = vsel %vm340, %v549, 0
        %v584 = vsel %vm340, %v550, 0
        %v587 = vsel %vm340, %v551, 0
        %v590 = vsel %vm340, %v552, 0
        %v593 = vsel %vm340, %v553, 0
        %v596 = vsel %vm340, %v554, 0
        %v599 = vsel %vm340, %v555, 0
        %v602 = vsel %vm340, %v556, 0
        %604 = vmatprep.subr.bf16.mxu0 0
        %605 = vmatpush1.bf16.msra.mxu0 0
        %606 = vmatprep.subr.bf16.mxu0 0
        %607 = vmatpush1.bf16.msra.mxu0 0
        %608 = vmatprep.subr.bf16.mxu0 0
        %609 = vmatpush1.bf16.msra.mxu0 0
        %610 = vmatprep.subr.bf16.mxu0 0
        %611 = vmatpush1.bf16.msra.mxu0 0
        %612 = vmatprep.subr.bf16.mxu0 0
        %613 = vmatpush1.bf16.msra.mxu0 0
        %614 = vmatprep.subr.bf16.mxu0 0
        %615 = vmatpush1.bf16.msra.mxu0 0
        %616 = vmatprep.subr.bf16.mxu0 0
        %617 = vmatpush1.bf16.msra.mxu0 %v577
        %618 = vmatprep.subr.bf16.mxu0 0
        %619 = vmatpush1.bf16.msra.mxu0 %v576
        %620 = vmatprep.subr.bf16.mxu0 0
        %621 = vmatpush2.bf16.msra.mxu0 0
        %622 = vmatprep.subr.bf16.mxu0 0
        %623 = vmatpush2.bf16.msra.mxu0 0
        %624 = vmatprep.subr.bf16.mxu0 0
        %625 = vmatpush2.bf16.msra.mxu0 0
        %626 = vmatprep.subr.bf16.mxu0 0
        %627 = vmatpush2.bf16.msra.mxu0 0
        %628 = vmatprep.subr.bf16.mxu0 0
        %629 = vmatpush2.bf16.msra.mxu0 0
        %630 = vmatprep.subr.bf16.mxu0 0
        %631 = vmatpush2.bf16.msra.mxu0 0
        %632 = vmatprep.subr.bf16.mxu0 0
        %633 = vmatpush2.bf16.msra.mxu0 0
        %634 = vmatprep.subr.bf16.mxu0 0
        %635 = vmatpush2.bf16.msra.mxu0 0
        %636 = vmatprep.mubr.bf16.mxu0 0
        %637 = vmatmul.mubr.bf16.gmra.mxu0 %v581
        %v638 = vpop.f32.mrf.mxu0
        %v639 = vadd.f32 %v566, %v638
        %v640 = vpop.f32.mrf.mxu0
        %v641 = vpop.f32.mrf.mxu0
        %v642 = vadd.f32 %v566, %v641
        %v643 = vpop.f32.mrf.mxu0
        %644 = vmatprep.mubr.bf16.mxu0 0
        %645 = vmatmul.mubr.bf16.gmra.mxu0 %v584
        %v646 = vpop.f32.mrf.mxu0
        %v647 = vadd.f32 %v566, %v646
        %v648 = vpop.f32.mrf.mxu0
        %v649 = vpop.f32.mrf.mxu0
        %v650 = vadd.f32 %v566, %v649
        %v651 = vpop.f32.mrf.mxu0
        %652 = vmatprep.mubr.bf16.mxu0 0
        %653 = vmatmul.mubr.bf16.gmra.mxu0 %v587
        %v654 = vpop.f32.mrf.mxu0
        %v655 = vadd.f32 %v566, %v654
        %v656 = vpop.f32.mrf.mxu0
        %v657 = vpop.f32.mrf.mxu0
        %v658 = vadd.f32 %v566, %v657
        %v659 = vpop.f32.mrf.mxu0
        %660 = vmatprep.mubr.bf16.mxu0 0
        %661 = vmatmul.mubr.bf16.gmra.mxu0 %v590
        %v662 = vpop.f32.mrf.mxu0
        %v663 = vadd.f32 %v566, %v662
        %v664 = vpop.f32.mrf.mxu0
        %v665 = vpop.f32.mrf.mxu0
        %v666 = vadd.f32 %v566, %v665
        %v667 = vpop.f32.mrf.mxu0
        %668 = vmatprep.mubr.bf16.mxu0 0
        %669 = vmatmul.mubr.bf16.gmra.mxu0 %v593
        %v670 = vpop.f32.mrf.mxu0
        %v671 = vadd.f32 %v566, %v670
        %v672 = vpop.f32.mrf.mxu0
        %v673 = vpop.f32.mrf.mxu0
        %v674 = vadd.f32 %v566, %v673
        %v675 = vpop.f32.mrf.mxu0
        %676 = vmatprep.mubr.bf16.mxu0 0
        %677 = vmatmul.mubr.bf16.gmra.mxu0 %v596
        %v678 = vpop.f32.mrf.mxu0
        %v679 = vadd.f32 %v566, %v678
        %v680 = vpop.f32.mrf.mxu0
        %v681 = vpop.f32.mrf.mxu0
        %v682 = vadd.f32 %v566, %v681
        %v683 = vpop.f32.mrf.mxu0
        %684 = vmatprep.mubr.bf16.mxu0 0
        %685 = vmatmul.mubr.bf16.gmra.mxu0 %v599
        %v686 = vpop.f32.mrf.mxu0
        %v687 = vadd.f32 %v566, %v686
        %v688 = vpop.f32.mrf.mxu0
        %v689 = vpop.f32.mrf.mxu0
        %v690 = vadd.f32 %v566, %v689
        %v691 = vpop.f32.mrf.mxu0
        %692 = vmatprep.mubr.bf16.mxu0 0
        %693 = vmatmul.mubr.bf16.gmra.mxu0 %v602
        %v694 = vpop.f32.mrf.mxu0
        %v695 = vadd.f32 %v566, %v694
        %v696 = vpop.f32.mrf.mxu0
        %v697 = vpop.f32.mrf.mxu0
        %v698 = vadd.f32 %v566, %v697
        %v699 = vpop.f32.mrf.mxu0
        %700 = vdwg.mxu0
        %v701 = vmax.f32 %v639, 0.0
        %v702 = vmax.f32 %v642, 0.0
        %v703 = vmax.f32 %v647, 0.0
        %v704 = vmax.f32 %v650, 0.0
        %v705 = vmax.f32 %v655, 0.0
        %v706 = vmax.f32 %v658, 0.0
        %v707 = vmax.f32 %v663, 0.0
        %v708 = vmax.f32 %v666, 0.0
        %v709 = vmax.f32 %v671, 0.0
        %v710 = vmax.f32 %v674, 0.0
        %v711 = vmax.f32 %v679, 0.0
        %v712 = vmax.f32 %v682, 0.0
        %v713 = vmax.f32 %v687, 0.0
        %v714 = vmax.f32 %v690, 0.0
        %v715 = vmax.f32 %v695, 0.0
        %v716 = vmax.f32 %v698, 0.0
        %v717 = vmul.f32 %v701, %v701
        %v718 = vmul.f32 %v702, %v702
        %v719 = vmul.f32 %v703, %v703
        %v720 = vmul.f32 %v704, %v704
        %v721 = vmul.f32 %v705, %v705
        %v722 = vmul.f32 %v706, %v706
        %v723 = vmul.f32 %v707, %v707
        %v724 = vmul.f32 %v708, %v708
        %v725 = vmul.f32 %v709, %v709
        %v726 = vmul.f32 %v710, %v710
        %v727 = vmul.f32 %v711, %v711
        %v728 = vmul.f32 %v712, %v712
        %v729 = vmul.f32 %v713, %v713
        %v730 = vmul.f32 %v714, %v714
        %v731 = vmul.f32 %v715, %v715
        %v732 = vmul.f32 %v716, %v716
        %vm733 = vcmask 523264
        %v734 = vsel %vm733, %v717, 0.0
        %735 = vadd.xlane.f32.xlu0 %v734
        %v736 = vpop.xlane.xlu0 %735
        %v737 = vsel %vm733, %v718, 0.0
        %738 = vadd.xlane.f32.xlu0 %v737
        %v739 = vpop.xlane.xlu0 %738
        %v740 = vsel %vm733, %v719, 0.0
        %741 = vadd.xlane.f32.xlu0 %v740
        %v742 = vpop.xlane.xlu0 %741
        %v743 = vsel %vm733, %v720, 0.0
        %744 = vadd.xlane.f32.xlu0 %v743
        %v745 = vpop.xlane.xlu0 %744
        %v746 = vsel %vm733, %v721, 0.0
        %747 = vadd.xlane.f32.xlu0 %v746
        %v748 = vpop.xlane.xlu0 %747
        %v749 = vsel %vm733, %v722, 0.0
        %750 = vadd.xlane.f32.xlu0 %v749
        %v751 = vpop.xlane.xlu0 %750
        %v752 = vsel %vm733, %v723, 0.0
        %753 = vadd.xlane.f32.xlu0 %v752
        %v754 = vpop.xlane.xlu0 %753
        %v755 = vsel %vm733, %v724, 0.0
        %756 = vadd.xlane.f32.xlu0 %v755
        %v757 = vpop.xlane.xlu0 %756
        %v758 = vsel %vm733, %v725, 0.0
        %759 = vadd.xlane.f32.xlu0 %v758
        %v760 = vpop.xlane.xlu0 %759
        %v761 = vsel %vm733, %v726, 0.0
        %762 = vadd.xlane.f32.xlu0 %v761
        %v763 = vpop.xlane.xlu0 %762
        %v764 = vsel %vm733, %v727, 0.0
        %765 = vadd.xlane.f32.xlu0 %v764
        %v766 = vpop.xlane.xlu0 %765
        %v767 = vsel %vm733, %v728, 0.0
        %768 = vadd.xlane.f32.xlu0 %v767
        %v769 = vpop.xlane.xlu0 %768
        %v770 = vsel %vm733, %v729, 0.0
        %771 = vadd.xlane.f32.xlu0 %v770
        %v772 = vpop.xlane.xlu0 %771
        %v773 = vsel %vm733, %v730, 0.0
        %774 = vadd.xlane.f32.xlu0 %v773
        %v775 = vpop.xlane.xlu0 %774
        %v776 = vsel %vm733, %v731, 0.0
        %777 = vadd.xlane.f32.xlu0 %v776
        %v778 = vpop.xlane.xlu0 %777
        %v779 = vsel %vm733, %v732, 0.0
        %780 = vadd.xlane.f32.xlu0 %v779
        %v781 = vpop.xlane.xlu0 %780
        %v782 = vrsqrt.pop %v736
        %v783 = vmul.f32 %v736, %v782
        %vm784 = vcmp.eq.f32.partialorder %v736, inf
        %v785 = vsel %vm784, %v736, %v783
        %vm786 = vcmp.eq.f32.partialorder %v736, 0.0
        %v787 = vand.u32 %v736, 2147483648
        %v788 = vsel %vm786, %v787, %v785
        %v789 = vrsqrt.pop %v739
        %v790 = vmul.f32 %v739, %v789
        %vm791 = vcmp.eq.f32.partialorder %v739, inf
        %v792 = vsel %vm791, %v739, %v790
        %vm793 = vcmp.eq.f32.partialorder %v739, 0.0
        %v794 = vand.u32 %v739, 2147483648
        %v795 = vsel %vm793, %v794, %v792
        %v796 = vrsqrt.pop %v742
        %v797 = vmul.f32 %v742, %v796
        %vm798 = vcmp.eq.f32.partialorder %v742, inf
        %v799 = vsel %vm798, %v742, %v797
        %vm800 = vcmp.eq.f32.partialorder %v742, 0.0
        %v801 = vand.u32 %v742, 2147483648
        %v802 = vsel %vm800, %v801, %v799
        %v803 = vrsqrt.pop %v745
        %v804 = vmul.f32 %v745, %v803
        %vm805 = vcmp.eq.f32.partialorder %v745, inf
        %v806 = vsel %vm805, %v745, %v804
        %vm807 = vcmp.eq.f32.partialorder %v745, 0.0
        %v808 = vand.u32 %v745, 2147483648
        %v809 = vsel %vm807, %v808, %v806
        %v810 = vrsqrt.pop %v748
        %v811 = vmul.f32 %v748, %v810
        %vm812 = vcmp.eq.f32.partialorder %v748, inf
        %v813 = vsel %vm812, %v748, %v811
        %vm814 = vcmp.eq.f32.partialorder %v748, 0.0
        %v815 = vand.u32 %v748, 2147483648
        %v816 = vsel %vm814, %v815, %v813
        %v817 = vrsqrt.pop %v751
        %v818 = vmul.f32 %v751, %v817
        %vm819 = vcmp.eq.f32.partialorder %v751, inf
        %v820 = vsel %vm819, %v751, %v818
        %vm821 = vcmp.eq.f32.partialorder %v751, 0.0
        %v822 = vand.u32 %v751, 2147483648
        %v823 = vsel %vm821, %v822, %v820
        %v824 = vrsqrt.pop %v754
        %v825 = vmul.f32 %v754, %v824
        %vm826 = vcmp.eq.f32.partialorder %v754, inf
        %v827 = vsel %vm826, %v754, %v825
        %vm828 = vcmp.eq.f32.partialorder %v754, 0.0
        %v829 = vand.u32 %v754, 2147483648
        %v830 = vsel %vm828, %v829, %v827
        %v831 = vrsqrt.pop %v757
        %v832 = vmul.f32 %v757, %v831
        %vm833 = vcmp.eq.f32.partialorder %v757, inf
        %v834 = vsel %vm833, %v757, %v832
        %vm835 = vcmp.eq.f32.partialorder %v757, 0.0
        %v836 = vand.u32 %v757, 2147483648
        %v837 = vsel %vm835, %v836, %v834
        %v838 = vrsqrt.pop %v760
        %v839 = vmul.f32 %v760, %v838
        %vm840 = vcmp.eq.f32.partialorder %v760, inf
        %v841 = vsel %vm840, %v760, %v839
        %vm842 = vcmp.eq.f32.partialorder %v760, 0.0
        %v843 = vand.u32 %v760, 2147483648
        %v844 = vsel %vm842, %v843, %v841
        %v845 = vrsqrt.pop %v763
        %v846 = vmul.f32 %v763, %v845
        %vm847 = vcmp.eq.f32.partialorder %v763, inf
        %v848 = vsel %vm847, %v763, %v846
        %vm849 = vcmp.eq.f32.partialorder %v763, 0.0
        %v850 = vand.u32 %v763, 2147483648
        %v851 = vsel %vm849, %v850, %v848
        %v852 = vrsqrt.pop %v766
        %v853 = vmul.f32 %v766, %v852
        %vm854 = vcmp.eq.f32.partialorder %v766, inf
        %v855 = vsel %vm854, %v766, %v853
        %vm856 = vcmp.eq.f32.partialorder %v766, 0.0
        %v857 = vand.u32 %v766, 2147483648
        %v858 = vsel %vm856, %v857, %v855
        %v859 = vrsqrt.pop %v769
        %v860 = vmul.f32 %v769, %v859
        %vm861 = vcmp.eq.f32.partialorder %v769, inf
        %v862 = vsel %vm861, %v769, %v860
        %vm863 = vcmp.eq.f32.partialorder %v769, 0.0
        %v864 = vand.u32 %v769, 2147483648
        %v865 = vsel %vm863, %v864, %v862
        %v866 = vrsqrt.pop %v772
        %v867 = vmul.f32 %v772, %v866
        %vm868 = vcmp.eq.f32.partialorder %v772, inf
        %v869 = vsel %vm868, %v772, %v867
        %vm870 = vcmp.eq.f32.partialorder %v772, 0.0
        %v871 = vand.u32 %v772, 2147483648
        %v872 = vsel %vm870, %v871, %v869
        %v873 = vrsqrt.pop %v775
        %v874 = vmul.f32 %v775, %v873
        %vm875 = vcmp.eq.f32.partialorder %v775, inf
        %v876 = vsel %vm875, %v775, %v874
        %vm877 = vcmp.eq.f32.partialorder %v775, 0.0
        %v878 = vand.u32 %v775, 2147483648
        %v879 = vsel %vm877, %v878, %v876
        %v880 = vrsqrt.pop %v778
        %v881 = vmul.f32 %v778, %v880
        %vm882 = vcmp.eq.f32.partialorder %v778, inf
        %v883 = vsel %vm882, %v778, %v881
        %vm884 = vcmp.eq.f32.partialorder %v778, 0.0
        %v885 = vand.u32 %v778, 2147483648
        %v886 = vsel %vm884, %v885, %v883
        %v887 = vrsqrt.pop %v781
        %v888 = vmul.f32 %v781, %v887
        %vm889 = vcmp.eq.f32.partialorder %v781, inf
        %v890 = vsel %vm889, %v781, %v888
        %vm891 = vcmp.eq.f32.partialorder %v781, 0.0
        %v892 = vand.u32 %v781, 2147483648
        %v893 = vsel %vm891, %v892, %v890
        %v894 = vadd.f32 %v788, 0.0001
        %v895 = vadd.f32 %v795, 0.0001
        %v896 = vadd.f32 %v802, 0.0001
        %v897 = vadd.f32 %v809, 0.0001
        %v898 = vadd.f32 %v816, 0.0001
        %v899 = vadd.f32 %v823, 0.0001
        %v900 = vadd.f32 %v830, 0.0001
        %v901 = vadd.f32 %v837, 0.0001
        %v902 = vadd.f32 %v844, 0.0001
        %v903 = vadd.f32 %v851, 0.0001
        %v904 = vadd.f32 %v858, 0.0001
        %v905 = vadd.f32 %v865, 0.0001
        %v906 = vadd.f32 %v872, 0.0001
        %v907 = vadd.f32 %v879, 0.0001
        %v908 = vadd.f32 %v886, 0.0001
        %v909 = vadd.f32 %v893, 0.0001
        %v910 = vrcp.pop %v894
        %v911 = vrcp.pop %v895
        %v912 = vrcp.pop %v896
        %v913 = vrcp.pop %v897
        %v914 = vrcp.pop %v898
        %v915 = vrcp.pop %v899
        %v916 = vrcp.pop %v900
        %v917 = vrcp.pop %v901
        %v918 = vrcp.pop %v902
        %v919 = vrcp.pop %v903
        %v920 = vrcp.pop %v904
        %v921 = vrcp.pop %v905
        %v922 = vrcp.pop %v906
        %v923 = vrcp.pop %v907
        %v924 = vrcp.pop %v908
        %v925 = vrcp.pop %v909
        %v926 = vmul.f32 %v701, %v910
        %v927 = vmul.f32 %v702, %v911
        %v928 = vmul.f32 %v703, %v912
        %v929 = vmul.f32 %v704, %v913
        %v930 = vmul.f32 %v705, %v914
        %v931 = vmul.f32 %v706, %v915
        %v932 = vmul.f32 %v707, %v916
        %v933 = vmul.f32 %v708, %v917
        %v934 = vmul.f32 %v709, %v918
        %v935 = vmul.f32 %v710, %v919
        %v936 = vmul.f32 %v711, %v920
        %v937 = vmul.f32 %v712, %v921
        %v938 = vmul.f32 %v713, %v922
        %v939 = vmul.f32 %v714, %v923
        %v940 = vmul.f32 %v715, %v924
        %v941 = vmul.f32 %v716, %v925
        %v942 = vpack.c.bf16 %v927, %v926
        %v943 = vpack.c.bf16 %v929, %v928
        %v944 = vpack.c.bf16 %v931, %v930
        %v945 = vpack.c.bf16 %v933, %v932
        %v946 = vpack.c.bf16 %v935, %v934
        %v947 = vpack.c.bf16 %v937, %v936
        %v948 = vpack.c.bf16 %v939, %v938
        %v949 = vpack.c.bf16 %v941, %v940
        %v950 = vld [vmem:[%s3] sm:$0xf]
        %v951 = vld [vmem:[%s3 + $0x4] sm:$0xf]
        %v952 = vld [vmem:[%s3 + $0x8] sm:$0xf]
        %v953 = vld [vmem:[%s3 + $0xc] sm:$0xf]
        %v954 = vld [vmem:[%s3 + $0x10] sm:$0xf]
        %v955 = vld [vmem:[%s3 + $0x14] sm:$0xf]
        %v956 = vld [vmem:[%s3 + $0x18] sm:$0xf]
        %v957 = vld [vmem:[%s3 + $0x1c] sm:$0xf]
        %v958 = vld [vmem:[%s4] sm:$0x1]
        %v960 = vlaneseq
        %v961 = vshrl.u32 %v960, 7
        %v962 = vsub.s32 0, %v961
        %v963 = vrot.slane %v958, %v962
        %v973 = vunpack.c.l.b16 %v950
        %v974 = vunpack.c.l.b16 %v951
        %v975 = vunpack.c.l.b16 %v952
        %v976 = vunpack.c.l.b16 %v953
        %v977 = vunpack.c.l.b16 %v954
        %v978 = vunpack.c.l.b16 %v955
        %v979 = vunpack.c.l.b16 %v956
        %v980 = vunpack.c.l.b16 %v957
        %v981 = vpack.c.b16 %v974, %v973
        %v982 = vpack.c.b16 %v976, %v975
        %v983 = vpack.c.b16 %v978, %v977
        %v984 = vpack.c.b16 %v980, %v979
        %v990 = vsel %vm733, %v942, 0
        %v993 = vsel %vm733, %v943, 0
        %v996 = vsel %vm733, %v944, 0
        %v999 = vsel %vm733, %v945, 0
        %v1002 = vsel %vm733, %v946, 0
        %v1005 = vsel %vm733, %v947, 0
        %v1008 = vsel %vm733, %v948, 0
        %v1011 = vsel %vm733, %v949, 0
        %1013 = vmatprep.subr.bf16.mxu0 0
        %1014 = vmatpush1.bf16.msra.mxu0 0
        %1015 = vmatprep.subr.bf16.mxu0 0
        %1016 = vmatpush1.bf16.msra.mxu0 0
        %1017 = vmatprep.subr.bf16.mxu0 0
        %1018 = vmatpush1.bf16.msra.mxu0 0
        %1019 = vmatprep.subr.bf16.mxu0 0
        %1020 = vmatpush1.bf16.msra.mxu0 0
        %1021 = vmatprep.subr.bf16.mxu0 0
        %1022 = vmatpush1.bf16.msra.mxu0 %v984
        %1023 = vmatprep.subr.bf16.mxu0 0
        %1024 = vmatpush1.bf16.msra.mxu0 %v983
        %1025 = vmatprep.subr.bf16.mxu0 0
        %1026 = vmatpush1.bf16.msra.mxu0 %v982
        %1027 = vmatprep.subr.bf16.mxu0 0
        %1028 = vmatpush1.bf16.msra.mxu0 %v981
        %1029 = vmatprep.subr.bf16.mxu0 0
        %1030 = vmatpush2.bf16.msra.mxu0 0
        %1031 = vmatprep.subr.bf16.mxu0 0
        %1032 = vmatpush2.bf16.msra.mxu0 0
        %1033 = vmatprep.subr.bf16.mxu0 0
        %1034 = vmatpush2.bf16.msra.mxu0 0
        %1035 = vmatprep.subr.bf16.mxu0 0
        %1036 = vmatpush2.bf16.msra.mxu0 0
        %1037 = vmatprep.subr.bf16.mxu0 0
        %1038 = vmatpush2.bf16.msra.mxu0 0
        %1039 = vmatprep.subr.bf16.mxu0 0
        %1040 = vmatpush2.bf16.msra.mxu0 0
        %1041 = vmatprep.subr.bf16.mxu0 0
        %1042 = vmatpush2.bf16.msra.mxu0 0
        %1043 = vmatprep.subr.bf16.mxu0 0
        %1044 = vmatpush2.bf16.msra.mxu0 0
        %1045 = vmatprep.mubr.bf16.mxu0 0
        %1046 = vmatmul.mubr.bf16.gmra.mxu0 %v990
        %v1047 = vpop.f32.mrf.mxu0
        %v1048 = vadd.f32 %v963, %v1047
        %v1049 = vpop.f32.mrf.mxu0
        %v1050 = vpop.f32.mrf.mxu0
        %v1051 = vadd.f32 %v963, %v1050
        %v1052 = vpop.f32.mrf.mxu0
        %1053 = vmatprep.mubr.bf16.mxu0 0
        %1054 = vmatmul.mubr.bf16.gmra.mxu0 %v993
        %v1055 = vpop.f32.mrf.mxu0
        %v1056 = vadd.f32 %v963, %v1055
        %v1057 = vpop.f32.mrf.mxu0
        %v1058 = vpop.f32.mrf.mxu0
        %v1059 = vadd.f32 %v963, %v1058
        %v1060 = vpop.f32.mrf.mxu0
        %1061 = vmatprep.mubr.bf16.mxu0 0
        %1062 = vmatmul.mubr.bf16.gmra.mxu0 %v996
        %v1063 = vpop.f32.mrf.mxu0
        %v1064 = vadd.f32 %v963, %v1063
        %v1065 = vpop.f32.mrf.mxu0
        %v1066 = vpop.f32.mrf.mxu0
        %v1067 = vadd.f32 %v963, %v1066
        %v1068 = vpop.f32.mrf.mxu0
        %1069 = vmatprep.mubr.bf16.mxu0 0
        %1070 = vmatmul.mubr.bf16.gmra.mxu0 %v999
        %v1071 = vpop.f32.mrf.mxu0
        %v1072 = vadd.f32 %v963, %v1071
        %v1073 = vpop.f32.mrf.mxu0
        %v1074 = vpop.f32.mrf.mxu0
        %v1075 = vadd.f32 %v963, %v1074
        %v1076 = vpop.f32.mrf.mxu0
        %1077 = vmatprep.mubr.bf16.mxu0 0
        %1078 = vmatmul.mubr.bf16.gmra.mxu0 %v1002
        %v1079 = vpop.f32.mrf.mxu0
        %v1080 = vadd.f32 %v963, %v1079
        %v1081 = vpop.f32.mrf.mxu0
        %v1082 = vpop.f32.mrf.mxu0
        %v1083 = vadd.f32 %v963, %v1082
        %v1084 = vpop.f32.mrf.mxu0
        %1085 = vmatprep.mubr.bf16.mxu0 0
        %1086 = vmatmul.mubr.bf16.gmra.mxu0 %v1005
        %v1087 = vpop.f32.mrf.mxu0
        %v1088 = vadd.f32 %v963, %v1087
        %v1089 = vpop.f32.mrf.mxu0
        %v1090 = vpop.f32.mrf.mxu0
        %v1091 = vadd.f32 %v963, %v1090
        %v1092 = vpop.f32.mrf.mxu0
        %1093 = vmatprep.mubr.bf16.mxu0 0
        %1094 = vmatmul.mubr.bf16.gmra.mxu0 %v1008
        %v1095 = vpop.f32.mrf.mxu0
        %v1096 = vadd.f32 %v963, %v1095
        %v1097 = vpop.f32.mrf.mxu0
        %v1098 = vpop.f32.mrf.mxu0
        %v1099 = vadd.f32 %v963, %v1098
        %v1100 = vpop.f32.mrf.mxu0
        %1101 = vmatprep.mubr.bf16.mxu0 0
        %1102 = vmatmul.mubr.bf16.gmra.mxu0 %v1011
        %v1103 = vpop.f32.mrf.mxu0
        %v1104 = vadd.f32 %v963, %v1103
        %v1105 = vpop.f32.mrf.mxu0
        %v1106 = vpop.f32.mrf.mxu0
        %v1107 = vadd.f32 %v963, %v1106
        %v1108 = vpop.f32.mrf.mxu0
        %1109 = vdwg.mxu0
        %v1110 = vmax.f32 %v1048, 0.0
        %v1111 = vmax.f32 %v1051, 0.0
        %v1112 = vmax.f32 %v1056, 0.0
        %v1113 = vmax.f32 %v1059, 0.0
        %v1114 = vmax.f32 %v1064, 0.0
        %v1115 = vmax.f32 %v1067, 0.0
        %v1116 = vmax.f32 %v1072, 0.0
        %v1117 = vmax.f32 %v1075, 0.0
        %v1118 = vmax.f32 %v1080, 0.0
        %v1119 = vmax.f32 %v1083, 0.0
        %v1120 = vmax.f32 %v1088, 0.0
        %v1121 = vmax.f32 %v1091, 0.0
        %v1122 = vmax.f32 %v1096, 0.0
        %v1123 = vmax.f32 %v1099, 0.0
        %v1124 = vmax.f32 %v1104, 0.0
        %v1125 = vmax.f32 %v1107, 0.0
        %v1126 = vpack.c.bf16 %v702, %v701
        %v1127 = vpack.c.bf16 %v704, %v703
        %v1128 = vpack.c.bf16 %v706, %v705
        %v1129 = vpack.c.bf16 %v708, %v707
        %v1130 = vpack.c.bf16 %v710, %v709
        %v1131 = vpack.c.bf16 %v712, %v711
        %v1132 = vpack.c.bf16 %v714, %v713
        %v1133 = vpack.c.bf16 %v716, %v715
        %v1134 = vld [vmem:[%s5] sm:$0xf]
        %v1135 = vld [vmem:[%s5 + $0x4] sm:$0xf]
        %v1136 = vld [vmem:[%s5 + $0x8] sm:$0xf]
        %v1137 = vld [vmem:[%s5 + $0xc] sm:$0xf]
        %v1138 = vld [vmem:[%s5 + $0x10] sm:$0xf]
        %v1139 = vld [vmem:[%s5 + $0x14] sm:$0xf]
        %v1140 = vld [vmem:[%s5 + $0x18] sm:$0xf]
        %v1141 = vld [vmem:[%s5 + $0x1c] sm:$0xf]
        %v1142 = vpack.c.bf16 %v1111, %v1110
        %v1143 = vpack.c.bf16 %v1113, %v1112
        %v1144 = vpack.c.bf16 %v1115, %v1114
        %v1145 = vpack.c.bf16 %v1117, %v1116
        %v1146 = vpack.c.bf16 %v1119, %v1118
        %v1147 = vpack.c.bf16 %v1121, %v1120
        %v1148 = vpack.c.bf16 %v1123, %v1122
        %v1149 = vpack.c.bf16 %v1125, %v1124
        %v1150 = vld [vmem:[%s6] sm:$0xf]
        %v1151 = vld [vmem:[%s6 + $0x4] sm:$0xf]
        %v1152 = vld [vmem:[%s6 + $0x8] sm:$0xf]
        %v1153 = vld [vmem:[%s6 + $0xc] sm:$0xf]
        %v1154 = vld [vmem:[%s6 + $0x10] sm:$0xf]
        %v1155 = vld [vmem:[%s6 + $0x14] sm:$0xf]
        %v1156 = vld [vmem:[%s6 + $0x18] sm:$0xf]
        %v1157 = vld [vmem:[%s6 + $0x1c] sm:$0xf]
        %v1166 = vunpack.c.l.b16 %v1150
        %v1167 = vunpack.c.l.b16 %v1151
        %v1168 = vunpack.c.l.b16 %v1152
        %v1169 = vunpack.c.l.b16 %v1153
        %v1170 = vunpack.c.l.b16 %v1154
        %v1171 = vunpack.c.l.b16 %v1155
        %v1172 = vunpack.c.l.b16 %v1156
        %v1173 = vunpack.c.l.b16 %v1157
        %v1174 = vpack.c.b16 %v1167, %v1166
        %v1175 = vpack.c.b16 %v1169, %v1168
        %v1176 = vpack.c.b16 %v1171, %v1170
        %v1177 = vpack.c.b16 %v1173, %v1172
        %v1183 = vsel %vm733, %v1142, 0
        %v1186 = vsel %vm733, %v1143, 0
        %v1189 = vsel %vm733, %v1144, 0
        %v1192 = vsel %vm733, %v1145, 0
        %v1195 = vsel %vm733, %v1146, 0
        %v1198 = vsel %vm733, %v1147, 0
        %v1201 = vsel %vm733, %v1148, 0
        %v1204 = vsel %vm733, %v1149, 0
        %1206 = vmatprep.subr.bf16.mxu0 0
        %1207 = vmatpush1.bf16.msra.mxu0 0
        %1208 = vmatprep.subr.bf16.mxu0 0
        %1209 = vmatpush1.bf16.msra.mxu0 0
        %1210 = vmatprep.subr.bf16.mxu0 0
        %1211 = vmatpush1.bf16.msra.mxu0 0
        %1212 = vmatprep.subr.bf16.mxu0 0
        %1213 = vmatpush1.bf16.msra.mxu0 0
        %1214 = vmatprep.subr.bf16.mxu0 0
        %1215 = vmatpush1.bf16.msra.mxu0 %v1177
        %1216 = vmatprep.subr.bf16.mxu0 0
        %1217 = vmatpush1.bf16.msra.mxu0 %v1176
        %1218 = vmatprep.subr.bf16.mxu0 0
        %1219 = vmatpush1.bf16.msra.mxu0 %v1175
        %1220 = vmatprep.subr.bf16.mxu0 0
        %1221 = vmatpush1.bf16.msra.mxu0 %v1174
        %1222 = vmatprep.subr.bf16.mxu0 0
        %1223 = vmatpush2.bf16.msra.mxu0 0
        %1224 = vmatprep.subr.bf16.mxu0 0
        %1225 = vmatpush2.bf16.msra.mxu0 0
        %1226 = vmatprep.subr.bf16.mxu0 0
        %1227 = vmatpush2.bf16.msra.mxu0 0
        %1228 = vmatprep.subr.bf16.mxu0 0
        %1229 = vmatpush2.bf16.msra.mxu0 0
        %1230 = vmatprep.subr.bf16.mxu0 0
        %1231 = vmatpush2.bf16.msra.mxu0 0
        %1232 = vmatprep.subr.bf16.mxu0 0
        %1233 = vmatpush2.bf16.msra.mxu0 0
        %1234 = vmatprep.subr.bf16.mxu0 0
        %1235 = vmatpush2.bf16.msra.mxu0 0
        %1236 = vmatprep.subr.bf16.mxu0 0
        %1237 = vmatpush2.bf16.msra.mxu0 0
        %1238 = vmatprep.mubr.bf16.mxu0 0
        %1239 = vmatmul.mubr.bf16.gmra.mxu0 %v1183
        %v1240 = vpop.f32.mrf.mxu0
        %v1241 = vadd.f32 0.0, %v1240
        %v1242 = vpop.f32.mrf.mxu0
        %v1243 = vpop.f32.mrf.mxu0
        %v1244 = vadd.f32 0.0, %v1243
        %v1245 = vpop.f32.mrf.mxu0
        %1246 = vmatprep.mubr.bf16.mxu0 0
        %1247 = vmatmul.mubr.bf16.gmra.mxu0 %v1186
        %v1248 = vpop.f32.mrf.mxu0
        %v1249 = vadd.f32 0.0, %v1248
        %v1250 = vpop.f32.mrf.mxu0
        %v1251 = vpop.f32.mrf.mxu0
        %v1252 = vadd.f32 0.0, %v1251
        %v1253 = vpop.f32.mrf.mxu0
        %1254 = vmatprep.mubr.bf16.mxu0 0
        %1255 = vmatmul.mubr.bf16.gmra.mxu0 %v1189
        %v1256 = vpop.f32.mrf.mxu0
        %v1257 = vadd.f32 0.0, %v1256
        %v1258 = vpop.f32.mrf.mxu0
        %v1259 = vpop.f32.mrf.mxu0
        %v1260 = vadd.f32 0.0, %v1259
        %v1261 = vpop.f32.mrf.mxu0
        %1262 = vmatprep.mubr.bf16.mxu0 0
        %1263 = vmatmul.mubr.bf16.gmra.mxu0 %v1192
        %v1264 = vpop.f32.mrf.mxu0
        %v1265 = vadd.f32 0.0, %v1264
        %v1266 = vpop.f32.mrf.mxu0
        %v1267 = vpop.f32.mrf.mxu0
        %v1268 = vadd.f32 0.0, %v1267
        %v1269 = vpop.f32.mrf.mxu0
        %1270 = vmatprep.mubr.bf16.mxu0 0
        %1271 = vmatmul.mubr.bf16.gmra.mxu0 %v1195
        %v1272 = vpop.f32.mrf.mxu0
        %v1273 = vadd.f32 0.0, %v1272
        %v1274 = vpop.f32.mrf.mxu0
        %v1275 = vpop.f32.mrf.mxu0
        %v1276 = vadd.f32 0.0, %v1275
        %v1277 = vpop.f32.mrf.mxu0
        %1278 = vmatprep.mubr.bf16.mxu0 0
        %1279 = vmatmul.mubr.bf16.gmra.mxu0 %v1198
        %v1280 = vpop.f32.mrf.mxu0
        %v1281 = vadd.f32 0.0, %v1280
        %v1282 = vpop.f32.mrf.mxu0
        %v1283 = vpop.f32.mrf.mxu0
        %v1284 = vadd.f32 0.0, %v1283
        %v1285 = vpop.f32.mrf.mxu0
        %1286 = vmatprep.mubr.bf16.mxu0 0
        %1287 = vmatmul.mubr.bf16.gmra.mxu0 %v1201
        %v1288 = vpop.f32.mrf.mxu0
        %v1289 = vadd.f32 0.0, %v1288
        %v1290 = vpop.f32.mrf.mxu0
        %v1291 = vpop.f32.mrf.mxu0
        %v1292 = vadd.f32 0.0, %v1291
        %v1293 = vpop.f32.mrf.mxu0
        %1294 = vmatprep.mubr.bf16.mxu0 0
        %1295 = vmatmul.mubr.bf16.gmra.mxu0 %v1204
        %v1296 = vpop.f32.mrf.mxu0
        %v1297 = vadd.f32 0.0, %v1296
        %v1298 = vpop.f32.mrf.mxu0
        %v1299 = vpop.f32.mrf.mxu0
        %v1300 = vadd.f32 0.0, %v1299
        %v1301 = vpop.f32.mrf.mxu0
        %1302 = vdwg.mxu0
        %v1311 = vunpack.c.l.b16 %v1134
        %v1312 = vunpack.c.l.b16 %v1135
        %v1313 = vunpack.c.l.b16 %v1136
        %v1314 = vunpack.c.l.b16 %v1137
        %v1315 = vunpack.c.l.b16 %v1138
        %v1316 = vunpack.c.l.b16 %v1139
        %v1317 = vunpack.c.l.b16 %v1140
        %v1318 = vunpack.c.l.b16 %v1141
        %v1319 = vpack.c.b16 %v1312, %v1311
        %v1320 = vpack.c.b16 %v1314, %v1313
        %v1321 = vpack.c.b16 %v1316, %v1315
        %v1322 = vpack.c.b16 %v1318, %v1317
        %v1328 = vsel %vm733, %v1126, 0
        %v1331 = vsel %vm733, %v1127, 0
        %v1334 = vsel %vm733, %v1128, 0
        %v1337 = vsel %vm733, %v1129, 0
        %v1340 = vsel %vm733, %v1130, 0
        %v1343 = vsel %vm733, %v1131, 0
        %v1346 = vsel %vm733, %v1132, 0
        %v1349 = vsel %vm733, %v1133, 0
        %1351 = vmatprep.subr.bf16.mxu0 0
        %1352 = vmatpush1.bf16.msra.mxu0 0
        %1353 = vmatprep.subr.bf16.mxu0 0
        %1354 = vmatpush1.bf16.msra.mxu0 0
        %1355 = vmatprep.subr.bf16.mxu0 0
        %1356 = vmatpush1.bf16.msra.mxu0 0
        %1357 = vmatprep.subr.bf16.mxu0 0
        %1358 = vmatpush1.bf16.msra.mxu0 0
        %1359 = vmatprep.subr.bf16.mxu0 0
        %1360 = vmatpush1.bf16.msra.mxu0 %v1322
        %1361 = vmatprep.subr.bf16.mxu0 0
        %1362 = vmatpush1.bf16.msra.mxu0 %v1321
        %1363 = vmatprep.subr.bf16.mxu0 0
        %1364 = vmatpush1.bf16.msra.mxu0 %v1320
        %1365 = vmatprep.subr.bf16.mxu0 0
        %1366 = vmatpush1.bf16.msra.mxu0 %v1319
        %1367 = vmatprep.subr.bf16.mxu0 0
        %1368 = vmatpush2.bf16.msra.mxu0 0
        %1369 = vmatprep.subr.bf16.mxu0 0
        %1370 = vmatpush2.bf16.msra.mxu0 0
        %1371 = vmatprep.subr.bf16.mxu0 0
        %1372 = vmatpush2.bf16.msra.mxu0 0
        %1373 = vmatprep.subr.bf16.mxu0 0
        %1374 = vmatpush2.bf16.msra.mxu0 0
        %1375 = vmatprep.subr.bf16.mxu0 0
        %1376 = vmatpush2.bf16.msra.mxu0 0
        %1377 = vmatprep.subr.bf16.mxu0 0
        %1378 = vmatpush2.bf16.msra.mxu0 0
        %1379 = vmatprep.subr.bf16.mxu0 0
        %1380 = vmatpush2.bf16.msra.mxu0 0
        %1381 = vmatprep.subr.bf16.mxu0 0
        %1382 = vmatpush2.bf16.msra.mxu0 0
        %1383 = vmatprep.mubr.bf16.mxu0 0
        %1384 = vmatmul.mubr.bf16.gmra.mxu0 %v1328
        %v1385 = vpop.f32.mrf.mxu0
        %v1386 = vadd.f32 %v1241, %v1385
        %v1387 = vpop.f32.mrf.mxu0
        %v1388 = vpop.f32.mrf.mxu0
        %v1389 = vadd.f32 %v1244, %v1388
        %v1390 = vpop.f32.mrf.mxu0
        %1391 = vmatprep.mubr.bf16.mxu0 0
        %1392 = vmatmul.mubr.bf16.gmra.mxu0 %v1331
        %v1393 = vpop.f32.mrf.mxu0
        %v1394 = vadd.f32 %v1249, %v1393
        %v1395 = vpop.f32.mrf.mxu0
        %v1396 = vpop.f32.mrf.mxu0
        %v1397 = vadd.f32 %v1252, %v1396
        %v1398 = vpop.f32.mrf.mxu0
        %1399 = vmatprep.mubr.bf16.mxu0 0
        %1400 = vmatmul.mubr.bf16.gmra.mxu0 %v1334
        %v1401 = vpop.f32.mrf.mxu0
        %v1402 = vadd.f32 %v1257, %v1401
        %v1403 = vpop.f32.mrf.mxu0
        %v1404 = vpop.f32.mrf.mxu0
        %v1405 = vadd.f32 %v1260, %v1404
        %v1406 = vpop.f32.mrf.mxu0
        %1407 = vmatprep.mubr.bf16.mxu0 0
        %1408 = vmatmul.mubr.bf16.gmra.mxu0 %v1337
        %v1409 = vpop.f32.mrf.mxu0
        %v1410 = vadd.f32 %v1265, %v1409
        %v1411 = vpop.f32.mrf.mxu0
        %v1412 = vpop.f32.mrf.mxu0
        %v1413 = vadd.f32 %v1268, %v1412
        %v1414 = vpop.f32.mrf.mxu0
        %1415 = vmatprep.mubr.bf16.mxu0 0
        %1416 = vmatmul.mubr.bf16.gmra.mxu0 %v1340
        %v1417 = vpop.f32.mrf.mxu0
        %v1418 = vadd.f32 %v1273, %v1417
        %v1419 = vpop.f32.mrf.mxu0
        %v1420 = vpop.f32.mrf.mxu0
        %v1421 = vadd.f32 %v1276, %v1420
        %v1422 = vpop.f32.mrf.mxu0
        %1423 = vmatprep.mubr.bf16.mxu0 0
        %1424 = vmatmul.mubr.bf16.gmra.mxu0 %v1343
        %v1425 = vpop.f32.mrf.mxu0
        %v1426 = vadd.f32 %v1281, %v1425
        %v1427 = vpop.f32.mrf.mxu0
        %v1428 = vpop.f32.mrf.mxu0
        %v1429 = vadd.f32 %v1284, %v1428
        %v1430 = vpop.f32.mrf.mxu0
        %1431 = vmatprep.mubr.bf16.mxu0 0
        %1432 = vmatmul.mubr.bf16.gmra.mxu0 %v1346
        %v1433 = vpop.f32.mrf.mxu0
        %v1434 = vadd.f32 %v1289, %v1433
        %v1435 = vpop.f32.mrf.mxu0
        %v1436 = vpop.f32.mrf.mxu0
        %v1437 = vadd.f32 %v1292, %v1436
        %v1438 = vpop.f32.mrf.mxu0
        %1439 = vmatprep.mubr.bf16.mxu0 0
        %1440 = vmatmul.mubr.bf16.gmra.mxu0 %v1349
        %v1441 = vpop.f32.mrf.mxu0
        %v1442 = vadd.f32 %v1297, %v1441
        %v1443 = vpop.f32.mrf.mxu0
        %v1444 = vpop.f32.mrf.mxu0
        %v1445 = vadd.f32 %v1300, %v1444
        %v1446 = vpop.f32.mrf.mxu0
        %1447 = vdwg.mxu0
        %v1448 = vld [vmem:[%s7] sm:$0x1]
        %v1450 = vlaneseq
        %v1451 = vshrl.u32 %v1450, 7
        %v1452 = vsub.s32 0, %v1451
        %v1453 = vrot.slane %v1448, %v1452
        %v1455 = vadd.f32 %v1386, %v1453
        %v1456 = vadd.f32 %v1389, %v1453
        %v1457 = vadd.f32 %v1394, %v1453
        %v1458 = vadd.f32 %v1397, %v1453
        %v1459 = vadd.f32 %v1402, %v1453
        %v1460 = vadd.f32 %v1405, %v1453
        %v1461 = vadd.f32 %v1410, %v1453
        %v1462 = vadd.f32 %v1413, %v1453
        %v1463 = vadd.f32 %v1418, %v1453
        %v1464 = vadd.f32 %v1421, %v1453
        %v1465 = vadd.f32 %v1426, %v1453
        %v1466 = vadd.f32 %v1429, %v1453
        %v1467 = vadd.f32 %v1434, %v1453
        %v1468 = vadd.f32 %v1437, %v1453
        %v1469 = vadd.f32 %v1442, %v1453
        %v1470 = vadd.f32 %v1445, %v1453
        %v1471 = vmax.f32 %v1455, 0.0
        %v1472 = vmax.f32 %v1456, 0.0
        %v1473 = vmax.f32 %v1457, 0.0
        %v1474 = vmax.f32 %v1458, 0.0
        %v1475 = vmax.f32 %v1459, 0.0
        %v1476 = vmax.f32 %v1460, 0.0
        %v1477 = vmax.f32 %v1461, 0.0
        %v1478 = vmax.f32 %v1462, 0.0
        %v1479 = vmax.f32 %v1463, 0.0
        %v1480 = vmax.f32 %v1464, 0.0
        %v1481 = vmax.f32 %v1465, 0.0
        %v1482 = vmax.f32 %v1466, 0.0
        %v1483 = vmax.f32 %v1467, 0.0
        %v1484 = vmax.f32 %v1468, 0.0
        %v1485 = vmax.f32 %v1469, 0.0
        %v1486 = vmax.f32 %v1470, 0.0
        %1487 = vst [vmem:[%s299] sm:$0xff] %v1471
        %1488 = vst [vmem:[%s299 + $0x8] sm:$0xff] %v1472
        %1489 = vst [vmem:[%s299 + $0x10] sm:$0xff] %v1473
        %1490 = vst [vmem:[%s299 + $0x18] sm:$0xff] %v1474
        %1491 = vst [vmem:[%s299 + $0x20] sm:$0xff] %v1475
        %1492 = vst [vmem:[%s299 + $0x28] sm:$0xff] %v1476
        %1493 = vst [vmem:[%s299 + $0x30] sm:$0xff] %v1477
        %1494 = vst [vmem:[%s299 + $0x38] sm:$0xff] %v1478
        %1495 = vst [vmem:[%s299 + $0x40] sm:$0xff] %v1479
        %1496 = vst [vmem:[%s299 + $0x48] sm:$0xff] %v1480
        %1497 = vst [vmem:[%s299 + $0x50] sm:$0xff] %v1481
        %1498 = vst [vmem:[%s299 + $0x58] sm:$0xff] %v1482
        %1499 = vst [vmem:[%s299 + $0x60] sm:$0xff] %v1483
        %1500 = vst [vmem:[%s299 + $0x68] sm:$0xff] %v1484
        %1501 = vst [vmem:[%s299 + $0x70] sm:$0xff] %v1485
        %1502 = vst [vmem:[%s299 + $0x78] sm:$0xff] %v1486
        %s1503 = sand.u32 %s203, 1
        %s1504 = scalar_lea.sflag [#allocation3], %s1503
        %s1505 = sand.u32 %s203, 1
        %s1506 = smul.addr %s1505, 128
        %s1507 = scalar_lea.vmem [#allocation2], %s1506
        // Predicated region
        $region53: #{tpu_custom_call.1} parent=51 // pred_check
          %p1508 = pneg %p213
        $region54: #{tpu_custom_call.1} parent=51 // pred_check_branch
          %1510 = sbr.rel (%p1508) target = $region56
        $region55: #{tpu_custom_call.1} parent=51 // pred_region
          %s1511 = smul.u32 16, %s22
          %s1513 = ssub.s32 2048, 2048
          %1514 = vsyncadd %s1504, %s1513
          %s1515 = smul.addr %s1511, 128
          %s1516 = scalar_lea.hbm %s8, %s1515
          %s1517 = sshll.u32 %s1507, 4
          %s1518 = int_to_ptr.vmem [resolvable:$true] %s1517
          %1523 = dma.vmem_to_hbm [thread:$0]  %s1518, 2048, %s1516, %s1504, 128, 128, 8
        $region56: #{tpu_custom_call.1} parent=51 // pred_fallthru
          _
      $region52: #{tpu_custom_call.1} parent=5 // pred_fallthru
        _
      %p1524 = scmp.le.s32.totalorder 2, %s17
      // Predicated region
      $region57: #{tpu_custom_call.1} parent=5 // pred_check
        %p1525 = pneg %p1524
      $region58: #{tpu_custom_call.1} parent=5 // pred_check_branch
        %1527 = sbr.rel (%p1525) target = $region60
      $region59: #{tpu_custom_call.1} parent=5 // pred_region
        %s1528 = ssub.s32 %s17, 2
        // Predicated region
        $region61: #{tpu_custom_call.1} parent=59 // pred_check
          %p1529 = pneg %p219
        $region62: #{tpu_custom_call.1} parent=59 // pred_check_branch
          %1531 = sbr.rel (%p1529) target = $region64
        $region63: #{tpu_custom_call.1} parent=59 // pred_region
          %s1532 = sand.u32 %s204, 1
          %s1533 = scalar_lea.sflag [#allocation3], %s1532
          %s1534 = sand.u32 %s204, 1
          %s1535 = smul.addr %s1534, 128
          %s1536 = scalar_lea.vmem [#allocation2], %s1535
          %1537 = dma.done %s1533, 2048
        $region64: #{tpu_custom_call.1} parent=59 // pred_fallthru
          _
      $region60: #{tpu_custom_call.1} parent=5 // pred_fallthru
        _
    $region6: #{tpu_custom_call.1} parent=1 // loop_footer
      %s21 = sadd.s32 1, %s17
    $region7: #{tpu_custom_call.1} parent=1 // loop_footer_branch
      %16 = sbr.rel target = $region3
    $region8: #{tpu_custom_call.1} parent=1 // loop_exit
      _
    %1538 = vsyncpa [#allocation3], 1
    %s1539 = scalar_lea.sflag [#allocation3], 1
    %1540 = vsyncpa %s1539, 1

</llo_original>
